<compile_context>
chip_gen: v5e
topology: v5e:2x2
jax: 0.10.0
libtpu: 0.0.40
codegen_flags: <defaults>
</compile_context>

<pallas_src>
import functools

import jax
import jax.numpy as jnp
from jax.experimental import pallas as pl
from jax.experimental.pallas import tpu as pltpu


def _gnn_kernel(time_step, a_in_ref, a_out_ref, x_ref,
                w_top_ref, w_bot_ref, bias_ref, u3w_ref, u5w_ref, o_ref):
    """One grid step = one batch element; the recurrent state `fan` is (N, D)."""
    a_in_m = a_in_ref[...]                     # (N, N) bf16, shared across batch/steps
    a_out_m = a_out_ref[...]                   # (N, N) bf16
    fan = x_ref[...]                           # (N, D) f32

    # Gate weights: leading-axis index 0 -> z (eq3), 1 -> r (eq4), 2 -> h (eq5).
    wz_t, wr_t, wh_t = w_top_ref[0], w_top_ref[1], w_top_ref[2]   # (D, D) f32
    wz_b, wr_b, wh_b = w_bot_ref[0], w_bot_ref[1], w_bot_ref[2]   # (D, D) f32
    bz, br, bh = bias_ref[0], bias_ref[1], bias_ref[2]            # (1, D) f32
    u3w = u3w_ref[...]                         # (D, D)
    u5w = u5w_ref[...]                         # (D, D)

    # time_step is small (3): full Python unroll is fine / preferred.
    for _ in range(time_step):
        # Adjacency contraction on the MXU in bf16 (f32 accumulation).
        fan_bf = fan.astype(jnp.bfloat16)
        a_in = jnp.dot(a_in_m, fan_bf, preferred_element_type=jnp.float32)    # (N, D)
        a_out = jnp.dot(a_out_m, fan_bf, preferred_element_type=jnp.float32)  # (N, D)

        # Shared fc_eq3_u(fan) term (torch uses it for BOTH zv and rv).
        u_term = jnp.dot(fan, u3w, preferred_element_type=jnp.float32)        # (N, D)

        # Three separate gate dots (no (M,3D) fuse + lane slices: D=32 < 128).
        zv = jax.nn.sigmoid(
            jnp.dot(a_in, wz_t, preferred_element_type=jnp.float32)
            + jnp.dot(a_out, wz_b, preferred_element_type=jnp.float32)
            + u_term + bz)
        rv = jax.nn.sigmoid(
            jnp.dot(a_in, wr_t, preferred_element_type=jnp.float32)
            + jnp.dot(a_out, wr_b, preferred_element_type=jnp.float32)
            + u_term + br)
        hv = jnp.tanh(
            jnp.dot(a_in, wh_t, preferred_element_type=jnp.float32)
            + jnp.dot(a_out, wh_b, preferred_element_type=jnp.float32)
            + jnp.dot(rv * fan, u5w, preferred_element_type=jnp.float32)
            + bh)

        fan = (1.0 - zv) * fan + zv * hv

    o_ref[...] = fan


def gnn_forward(x, in_matrix, out_matrix, params, time_step, batch_parallel=False):
    """x: (B, N, D) float32. Returns (updated nodes (B, N, D), in_matrix).

    batch_parallel=False -> grid axis marked "arbitrary" (one TC; best for tiny B).
    batch_parallel=True  -> grid axis marked "parallel" (v7x splits batches across
                            its two TensorCores when per-step work is large enough).
    """
    B, N, D = x.shape
    (w3, b3, u3w, u3b, w4, b4, u4w, u4b, w5, b5, u5w, u5b) = params
    del u4w, u4b  # fc_eq4_u exists in __init__ but is unused in forward (torch quirk).

    # Block second-to-last dim must be a multiple of 8 (or the full dim).
    assert N % 8 == 0, "node_num must be a multiple of 8"  # TODO(synk): pad N otherwise

    # --- host-side parameter packing -------------------------------------
    # Per-gate weights split into top/bot halves of the 2D input (avoids the
    # lane-axis concat of [a_in, a_out]); stacked on a leading axis so the
    # kernel indexes them with free leading-axis loads.
    w_top = jnp.stack([w3[:D], w4[:D], w5[:D]], axis=0)       # (3, D, D)
    w_bot = jnp.stack([w3[D:], w4[D:], w5[D:]], axis=0)       # (3, D, D)
    bias = jnp.stack([b3 + u3b, b4 + u3b, b5 + u5b], axis=0)  # (3, 1, D)

    # Shared adjacency (identical for every batch element), bf16 for the MXU.
    a_in = in_matrix.astype(jnp.bfloat16)    # (N, N)
    a_out = out_matrix.astype(jnp.bfloat16)  # (N, N)

    x_flat = x.reshape(B * N, D).astype(jnp.float32)

    # --- VMEM budget: resident set (assume double-buffering) + headroom ---
    f32b, bf16b = 4, 2
    adj_bytes = 2 * N * N * bf16b
    wgt_bytes = (2 * 3 * D * D + 3 * D + 2 * D * D) * f32b
    io_bytes = 2 * N * D * f32b
    resident = 2 * (adj_bytes + wgt_bytes + io_bytes)
    vmem_limit = int(min(64 * 1024 * 1024, max(4 * 1024 * 1024, 4 * resident)))

    const = lambda shape: pl.BlockSpec(shape, lambda b: (0,) * len(shape))

    out_flat = pl.pallas_call(
        functools.partial(_gnn_kernel, time_step),
        out_shape=jax.ShapeDtypeStruct((B * N, D), jnp.float32),
        grid_spec=pltpu.PrefetchScalarGridSpec(
            num_scalar_prefetch=0,
            grid=(B,),
            in_specs=[
                const((N, N)),                               # in_matrix  (resident)
                const((N, N)),                               # out_matrix (resident)
                pl.BlockSpec((N, D), lambda b: (b, 0)),      # node features (per batch)
                const((3, D, D)),                            # gate weights, top halves
                const((3, D, D)),                            # gate weights, bottom halves
                const((3, 1, D)),                            # folded biases
                const((D, D)),                               # fc_eq3_u weight
                const((D, D)),                               # fc_eq5_u weight
            ],
            out_specs=pl.BlockSpec((N, D), lambda b: (b, 0)),
        ),
        input_output_aliases={2: 0},   # fan overwrites the node features in place
        compiler_params=pltpu.CompilerParams(
            dimension_semantics=(("parallel",) if batch_parallel else ("arbitrary",)),
            vmem_limit_bytes=vmem_limit),
    )(a_in, a_out, x_flat, w_top, w_bot, bias, u3w, u5w)

    return out_flat.reshape(B, N, D), in_matrix


def _reference_forward(x, in_matrix, out_matrix, params, time_step):
    """Pure-JAX f32 reference mirroring the torch forward (eval mode)."""
    (w3, b3, u3w, u3b, w4, b4, u4w, u4b, w5, b5, u5w, u5b) = params
    fan = x
    for _ in range(time_step):
        a_in = jnp.einsum("nm,bmd->bnd", in_matrix, fan)
        a_out = jnp.einsum("nm,bmd->bnd", out_matrix, fan)
        av = jnp.concatenate([a_in, a_out], axis=-1)
        zv = jax.nn.sigmoid(av @ w3 + b3 + fan @ u3w + u3b)
        rv = jax.nn.sigmoid(av @ w4 + b4 + fan @ u3w + u3b)
        hv = jnp.tanh(av @ w5 + b5 + (rv * fan) @ u5w + u5b)
        fan = (1.0 - zv) * fan + zv * hv
    return fan


def _init_params(key, input_dim):
    """Deterministic parameter init. Weights stored as (in_features, out_features)."""
    D = input_dim
    ks = jax.random.split(key, 12)
    def w(k, shape):
        return (jax.random.uniform(k, shape, jnp.float32) - 0.5) * 0.2
    return (
        w(ks[0], (2 * D, D)), w(ks[1], (1, D)),   # fc_eq3_w
        w(ks[2], (D, D)),     w(ks[3], (1, D)),   # fc_eq3_u
        w(ks[4], (2 * D, D)), w(ks[5], (1, D)),   # fc_eq4_w
        w(ks[6], (D, D)),     w(ks[7], (1, D)),   # fc_eq4_u (unused in forward)
        w(ks[8], (2 * D, D)), w(ks[9], (1, D)),   # fc_eq5_w
        w(ks[10], (D, D)),    w(ks[11], (1, D)),  # fc_eq5_u
    )


if __name__ == "__main__":
    key = jax.random.PRNGKey(0)
    B, N, D = 2, 8, 32          # batch, node_num, input_dim
    TIME_STEP = 3

    k_x, k_in, k_out, k_p = jax.random.split(key, 4)
    x = jax.random.normal(k_x, (B, N, D), jnp.float32)
    # Simple row-normalized random adjacency-like matrices.
    in_matrix = jax.random.uniform(k_in, (N, N), jnp.float32)
    in_matrix = in_matrix / jnp.sum(in_matrix, axis=-1, keepdims=True)
    out_matrix = jax.random.uniform(k_out, (N, N), jnp.float32)
    out_matrix = out_matrix / jnp.sum(out_matrix, axis=-1, keepdims=True)

    params = _init_params(k_p, D)

    ref = _reference_forward(x, in_matrix, out_matrix, params, TIME_STEP)

    # Default: sequential batch grid on one TensorCore (best at toy sizes).
    nodes_out, ret_in_matrix = gnn_forward(x, in_matrix, out_matrix, params, TIME_STEP)
    nodes_out = jax.block_until_ready(nodes_out)
    assert nodes_out.shape == (B, N, D)
    assert ret_in_matrix.shape == (N, N)
    # bf16 adjacency-dot operands (f32 accumulation) -> loosened tolerance.
    assert jnp.allclose(nodes_out, ref, atol=3e-2, rtol=3e-2)

    # v7x-style: batch grid axis marked "parallel" (megacore split). Same result.
    nodes_out2, _ = gnn_forward(x, in_matrix, out_matrix, params, TIME_STEP,
                                batch_parallel=True)
    nodes_out2 = jax.block_until_ready(nodes_out2)
    assert jnp.allclose(nodes_out2, ref, atol=3e-2, rtol=3e-2)

    print("KERNEL_OK")
</pallas_src>

<mosaic_0001>
module attributes {stable_mosaic.version = 11 : i64} {
  func.func @_gnn_kernel(%arg0: i32, %arg1: memref<8x8xbf16, #tpu.memory_space<vmem>>, %arg2: memref<8x8xbf16, #tpu.memory_space<vmem>>, %arg3: memref<8x32xf32, #tpu.memory_space<vmem>>, %arg4: memref<3x32x32xf32, #tpu.memory_space<vmem>>, %arg5: memref<3x32x32xf32, #tpu.memory_space<vmem>>, %arg6: memref<3x1x32xf32, #tpu.memory_space<vmem>>, %arg7: memref<32x32xf32, #tpu.memory_space<vmem>>, %arg8: memref<32x32xf32, #tpu.memory_space<vmem>>, %arg9: memref<8x32xf32, #tpu.memory_space<vmem>>) attributes {dimension_semantics = [#tpu.dimension_semantics<arbitrary>], iteration_bounds = array<i64: 2>, scalar_prefetch = 0 : i64, scratch_operands = 0 : i64, tpu.core_type = #tpu.core_type<tc>, window_params = [{pipeline_mode = #tpu.pipeline_mode<synchronous>, transform_indices = @transform_0, window_bounds = array<i64: 8, 8>}, {pipeline_mode = #tpu.pipeline_mode<synchronous>, transform_indices = @transform_1, window_bounds = array<i64: 8, 8>}, {transform_indices = @transform_2, window_bounds = array<i64: 8, 32>}, {pipeline_mode = #tpu.pipeline_mode<synchronous>, transform_indices = @transform_3, window_bounds = array<i64: 3, 32, 32>}, {pipeline_mode = #tpu.pipeline_mode<synchronous>, transform_indices = @transform_4, window_bounds = array<i64: 3, 32, 32>}, {pipeline_mode = #tpu.pipeline_mode<synchronous>, transform_indices = @transform_5, window_bounds = array<i64: 3, 1, 32>}, {pipeline_mode = #tpu.pipeline_mode<synchronous>, transform_indices = @transform_6, window_bounds = array<i64: 32, 32>}, {pipeline_mode = #tpu.pipeline_mode<synchronous>, transform_indices = @transform_7, window_bounds = array<i64: 32, 32>}, {transform_indices = @transform_8, window_bounds = array<i64: 8, 32>}]} {
    %c0 = arith.constant 0 : index
    %c0_0 = arith.constant 0 : index
    %0 = vector.load %arg1[%c0, %c0_0] : memref<8x8xbf16, #tpu.memory_space<vmem>>, vector<8x8xbf16>
    %c0_1 = arith.constant 0 : index
    %c0_2 = arith.constant 0 : index
    %1 = vector.load %arg2[%c0_1, %c0_2] : memref<8x8xbf16, #tpu.memory_space<vmem>>, vector<8x8xbf16>
    %c0_3 = arith.constant 0 : index
    %c0_4 = arith.constant 0 : index
    %2 = vector.load %arg3[%c0_3, %c0_4] : memref<8x32xf32, #tpu.memory_space<vmem>>, vector<8x32xf32>
    %c0_5 = arith.constant 0 : index
    %c0_6 = arith.constant 0 : index
    %c0_7 = arith.constant 0 : index
    %3 = vector.load %arg4[%c0_5, %c0_6, %c0_7] : memref<3x32x32xf32, #tpu.memory_space<vmem>>, vector<1x32x32xf32>
    %4 = vector.shape_cast %3 : vector<1x32x32xf32> to vector<32x32xf32>
    %c1 = arith.constant 1 : index
    %c0_8 = arith.constant 0 : index
    %c0_9 = arith.constant 0 : index
    %5 = vector.load %arg4[%c1, %c0_8, %c0_9] : memref<3x32x32xf32, #tpu.memory_space<vmem>>, vector<1x32x32xf32>
    %6 = vector.shape_cast %5 : vector<1x32x32xf32> to vector<32x32xf32>
    %c2 = arith.constant 2 : index
    %c0_10 = arith.constant 0 : index
    %c0_11 = arith.constant 0 : index
    %7 = vector.load %arg4[%c2, %c0_10, %c0_11] : memref<3x32x32xf32, #tpu.memory_space<vmem>>, vector<1x32x32xf32>
    %8 = vector.shape_cast %7 : vector<1x32x32xf32> to vector<32x32xf32>
    %c0_12 = arith.constant 0 : index
    %c0_13 = arith.constant 0 : index
    %c0_14 = arith.constant 0 : index
    %9 = vector.load %arg5[%c0_12, %c0_13, %c0_14] : memref<3x32x32xf32, #tpu.memory_space<vmem>>, vector<1x32x32xf32>
    %10 = vector.shape_cast %9 : vector<1x32x32xf32> to vector<32x32xf32>
    %c1_15 = arith.constant 1 : index
    %c0_16 = arith.constant 0 : index
    %c0_17 = arith.constant 0 : index
    %11 = vector.load %arg5[%c1_15, %c0_16, %c0_17] : memref<3x32x32xf32, #tpu.memory_space<vmem>>, vector<1x32x32xf32>
    %12 = vector.shape_cast %11 : vector<1x32x32xf32> to vector<32x32xf32>
    %c2_18 = arith.constant 2 : index
    %c0_19 = arith.constant 0 : index
    %c0_20 = arith.constant 0 : index
    %13 = vector.load %arg5[%c2_18, %c0_19, %c0_20] : memref<3x32x32xf32, #tpu.memory_space<vmem>>, vector<1x32x32xf32>
    %14 = vector.shape_cast %13 : vector<1x32x32xf32> to vector<32x32xf32>
    %c0_21 = arith.constant 0 : index
    %c0_22 = arith.constant 0 : index
    %c0_23 = arith.constant 0 : index
    %15 = vector.load %arg6[%c0_21, %c0_22, %c0_23] : memref<3x1x32xf32, #tpu.memory_space<vmem>>, vector<1x1x32xf32>
    %16 = vector.shape_cast %15 : vector<1x1x32xf32> to vector<1x32xf32>
    %c1_24 = arith.constant 1 : index
    %c0_25 = arith.constant 0 : index
    %c0_26 = arith.constant 0 : index
    %17 = vector.load %arg6[%c1_24, %c0_25, %c0_26] : memref<3x1x32xf32, #tpu.memory_space<vmem>>, vector<1x1x32xf32>
    %18 = vector.shape_cast %17 : vector<1x1x32xf32> to vector<1x32xf32>
    %c2_27 = arith.constant 2 : index
    %c0_28 = arith.constant 0 : index
    %c0_29 = arith.constant 0 : index
    %19 = vector.load %arg6[%c2_27, %c0_28, %c0_29] : memref<3x1x32xf32, #tpu.memory_space<vmem>>, vector<1x1x32xf32>
    %20 = vector.shape_cast %19 : vector<1x1x32xf32> to vector<1x32xf32>
    %c0_30 = arith.constant 0 : index
    %c0_31 = arith.constant 0 : index
    %21 = vector.load %arg7[%c0_30, %c0_31] : memref<32x32xf32, #tpu.memory_space<vmem>>, vector<32x32xf32>
    %c0_32 = arith.constant 0 : index
    %c0_33 = arith.constant 0 : index
    %22 = vector.load %arg8[%c0_32, %c0_33] : memref<32x32xf32, #tpu.memory_space<vmem>>, vector<32x32xf32>
    %23 = arith.truncf %2 : vector<8x32xf32> to vector<8x32xbf16>
    %cst = arith.constant dense<0.000000e+00> : vector<8x32xf32>
    %24 = tpu.matmul %0, %23, %cst {dimension_numbers = #tpu.dot_dimension_numbers<[1], [0], [0], [1], [0, 0, 1, 1], [], []>} : vector<8x8xbf16>, vector<8x32xbf16>, vector<8x32xf32> -> vector<8x32xf32>
    %cst_34 = arith.constant dense<0.000000e+00> : vector<8x32xf32>
    %25 = tpu.matmul %1, %23, %cst_34 {dimension_numbers = #tpu.dot_dimension_numbers<[1], [0], [0], [1], [0, 0, 1, 1], [], []>} : vector<8x8xbf16>, vector<8x32xbf16>, vector<8x32xf32> -> vector<8x32xf32>
    %cst_35 = arith.constant dense<0.000000e+00> : vector<8x32xf32>
    %26 = tpu.matmul %2, %21, %cst_35 {dimension_numbers = #tpu.dot_dimension_numbers<[1], [0], [0], [1], [0, 0, 1, 1], [], []>} : vector<8x32xf32>, vector<32x32xf32>, vector<8x32xf32> -> vector<8x32xf32>
    %cst_36 = arith.constant dense<0.000000e+00> : vector<8x32xf32>
    %27 = tpu.matmul %24, %4, %cst_36 {dimension_numbers = #tpu.dot_dimension_numbers<[1], [0], [0], [1], [0, 0, 1, 1], [], []>} : vector<8x32xf32>, vector<32x32xf32>, vector<8x32xf32> -> vector<8x32xf32>
    %cst_37 = arith.constant dense<0.000000e+00> : vector<8x32xf32>
    %28 = tpu.matmul %25, %10, %cst_37 {dimension_numbers = #tpu.dot_dimension_numbers<[1], [0], [0], [1], [0, 0, 1, 1], [], []>} : vector<8x32xf32>, vector<32x32xf32>, vector<8x32xf32> -> vector<8x32xf32>
    %29 = arith.addf %27, %28 : vector<8x32xf32>
    %30 = arith.addf %29, %26 : vector<8x32xf32>
    %31 = vector.broadcast %16 : vector<1x32xf32> to vector<8x32xf32>
    %32 = arith.addf %30, %31 : vector<8x32xf32>
    %33 = arith.negf %32 : vector<8x32xf32>
    %34 = math.exp %33 : vector<8x32xf32>
    %cst_38 = arith.constant 1.000000e+00 : f32
    %35 = vector.broadcast %cst_38 : f32 to vector<8x32xf32>
    %36 = arith.addf %35, %34 : vector<8x32xf32>
    %37 = arith.divf %35, %36 : vector<8x32xf32>
    %cst_39 = arith.constant dense<0.000000e+00> : vector<8x32xf32>
    %38 = tpu.matmul %24, %6, %cst_39 {dimension_numbers = #tpu.dot_dimension_numbers<[1], [0], [0], [1], [0, 0, 1, 1], [], []>} : vector<8x32xf32>, vector<32x32xf32>, vector<8x32xf32> -> vector<8x32xf32>
    %cst_40 = arith.constant dense<0.000000e+00> : vector<8x32xf32>
    %39 = tpu.matmul %25, %12, %cst_40 {dimension_numbers = #tpu.dot_dimension_numbers<[1], [0], [0], [1], [0, 0, 1, 1], [], []>} : vector<8x32xf32>, vector<32x32xf32>, vector<8x32xf32> -> vector<8x32xf32>
    %40 = arith.addf %38, %39 : vector<8x32xf32>
    %41 = arith.addf %40, %26 : vector<8x32xf32>
    %42 = vector.broadcast %18 : vector<1x32xf32> to vector<8x32xf32>
    %43 = arith.addf %41, %42 : vector<8x32xf32>
    %44 = arith.negf %43 : vector<8x32xf32>
    %45 = math.exp %44 : vector<8x32xf32>
    %cst_41 = arith.constant 1.000000e+00 : f32
    %46 = vector.broadcast %cst_41 : f32 to vector<8x32xf32>
    %47 = arith.addf %46, %45 : vector<8x32xf32>
    %48 = arith.divf %46, %47 : vector<8x32xf32>
    %cst_42 = arith.constant dense<0.000000e+00> : vector<8x32xf32>
    %49 = tpu.matmul %24, %8, %cst_42 {dimension_numbers = #tpu.dot_dimension_numbers<[1], [0], [0], [1], [0, 0, 1, 1], [], []>} : vector<8x32xf32>, vector<32x32xf32>, vector<8x32xf32> -> vector<8x32xf32>
    %cst_43 = arith.constant dense<0.000000e+00> : vector<8x32xf32>
    %50 = tpu.matmul %25, %14, %cst_43 {dimension_numbers = #tpu.dot_dimension_numbers<[1], [0], [0], [1], [0, 0, 1, 1], [], []>} : vector<8x32xf32>, vector<32x32xf32>, vector<8x32xf32> -> vector<8x32xf32>
    %51 = arith.addf %49, %50 : vector<8x32xf32>
    %52 = arith.mulf %48, %2 : vector<8x32xf32>
    %cst_44 = arith.constant dense<0.000000e+00> : vector<8x32xf32>
    %53 = tpu.matmul %52, %22, %cst_44 {dimension_numbers = #tpu.dot_dimension_numbers<[1], [0], [0], [1], [0, 0, 1, 1], [], []>} : vector<8x32xf32>, vector<32x32xf32>, vector<8x32xf32> -> vector<8x32xf32>
    %54 = arith.addf %51, %53 : vector<8x32xf32>
    %55 = vector.broadcast %20 : vector<1x32xf32> to vector<8x32xf32>
    %56 = arith.addf %54, %55 : vector<8x32xf32>
    %57 = math.tanh %56 : vector<8x32xf32>
    %cst_45 = arith.constant 1.000000e+00 : f32
    %58 = vector.broadcast %cst_45 : f32 to vector<8x32xf32>
    %59 = arith.subf %58, %37 : vector<8x32xf32>
    %60 = arith.mulf %59, %2 : vector<8x32xf32>
    %61 = arith.mulf %37, %57 : vector<8x32xf32>
    %62 = arith.addf %60, %61 : vector<8x32xf32>
    %63 = arith.truncf %62 : vector<8x32xf32> to vector<8x32xbf16>
    %cst_46 = arith.constant dense<0.000000e+00> : vector<8x32xf32>
    %64 = tpu.matmul %0, %63, %cst_46 {dimension_numbers = #tpu.dot_dimension_numbers<[1], [0], [0], [1], [0, 0, 1, 1], [], []>} : vector<8x8xbf16>, vector<8x32xbf16>, vector<8x32xf32> -> vector<8x32xf32>
    %cst_47 = arith.constant dense<0.000000e+00> : vector<8x32xf32>
    %65 = tpu.matmul %1, %63, %cst_47 {dimension_numbers = #tpu.dot_dimension_numbers<[1], [0], [0], [1], [0, 0, 1, 1], [], []>} : vector<8x8xbf16>, vector<8x32xbf16>, vector<8x32xf32> -> vector<8x32xf32>
    %cst_48 = arith.constant dense<0.000000e+00> : vector<8x32xf32>
    %66 = tpu.matmul %62, %21, %cst_48 {dimension_numbers = #tpu.dot_dimension_numbers<[1], [0], [0], [1], [0, 0, 1, 1], [], []>} : vector<8x32xf32>, vector<32x32xf32>, vector<8x32xf32> -> vector<8x32xf32>
    %cst_49 = arith.constant dense<0.000000e+00> : vector<8x32xf32>
    %67 = tpu.matmul %64, %4, %cst_49 {dimension_numbers = #tpu.dot_dimension_numbers<[1], [0], [0], [1], [0, 0, 1, 1], [], []>} : vector<8x32xf32>, vector<32x32xf32>, vector<8x32xf32> -> vector<8x32xf32>
    %cst_50 = arith.constant dense<0.000000e+00> : vector<8x32xf32>
    %68 = tpu.matmul %65, %10, %cst_50 {dimension_numbers = #tpu.dot_dimension_numbers<[1], [0], [0], [1], [0, 0, 1, 1], [], []>} : vector<8x32xf32>, vector<32x32xf32>, vector<8x32xf32> -> vector<8x32xf32>
    %69 = arith.addf %67, %68 : vector<8x32xf32>
    %70 = arith.addf %69, %66 : vector<8x32xf32>
    %71 = vector.broadcast %16 : vector<1x32xf32> to vector<8x32xf32>
    %72 = arith.addf %70, %71 : vector<8x32xf32>
    %73 = arith.negf %72 : vector<8x32xf32>
    %74 = math.exp %73 : vector<8x32xf32>
    %cst_51 = arith.constant 1.000000e+00 : f32
    %75 = vector.broadcast %cst_51 : f32 to vector<8x32xf32>
    %76 = arith.addf %75, %74 : vector<8x32xf32>
    %77 = arith.divf %75, %76 : vector<8x32xf32>
    %cst_52 = arith.constant dense<0.000000e+00> : vector<8x32xf32>
    %78 = tpu.matmul %64, %6, %cst_52 {dimension_numbers = #tpu.dot_dimension_numbers<[1], [0], [0], [1], [0, 0, 1, 1], [], []>} : vector<8x32xf32>, vector<32x32xf32>, vector<8x32xf32> -> vector<8x32xf32>
    %cst_53 = arith.constant dense<0.000000e+00> : vector<8x32xf32>
    %79 = tpu.matmul %65, %12, %cst_53 {dimension_numbers = #tpu.dot_dimension_numbers<[1], [0], [0], [1], [0, 0, 1, 1], [], []>} : vector<8x32xf32>, vector<32x32xf32>, vector<8x32xf32> -> vector<8x32xf32>
    %80 = arith.addf %78, %79 : vector<8x32xf32>
    %81 = arith.addf %80, %66 : vector<8x32xf32>
    %82 = vector.broadcast %18 : vector<1x32xf32> to vector<8x32xf32>
    %83 = arith.addf %81, %82 : vector<8x32xf32>
    %84 = arith.negf %83 : vector<8x32xf32>
    %85 = math.exp %84 : vector<8x32xf32>
    %cst_54 = arith.constant 1.000000e+00 : f32
    %86 = vector.broadcast %cst_54 : f32 to vector<8x32xf32>
    %87 = arith.addf %86, %85 : vector<8x32xf32>
    %88 = arith.divf %86, %87 : vector<8x32xf32>
    %cst_55 = arith.constant dense<0.000000e+00> : vector<8x32xf32>
    %89 = tpu.matmul %64, %8, %cst_55 {dimension_numbers = #tpu.dot_dimension_numbers<[1], [0], [0], [1], [0, 0, 1, 1], [], []>} : vector<8x32xf32>, vector<32x32xf32>, vector<8x32xf32> -> vector<8x32xf32>
    %cst_56 = arith.constant dense<0.000000e+00> : vector<8x32xf32>
    %90 = tpu.matmul %65, %14, %cst_56 {dimension_numbers = #tpu.dot_dimension_numbers<[1], [0], [0], [1], [0, 0, 1, 1], [], []>} : vector<8x32xf32>, vector<32x32xf32>, vector<8x32xf32> -> vector<8x32xf32>
    %91 = arith.addf %89, %90 : vector<8x32xf32>
    %92 = arith.mulf %88, %62 : vector<8x32xf32>
    %cst_57 = arith.constant dense<0.000000e+00> : vector<8x32xf32>
    %93 = tpu.matmul %92, %22, %cst_57 {dimension_numbers = #tpu.dot_dimension_numbers<[1], [0], [0], [1], [0, 0, 1, 1], [], []>} : vector<8x32xf32>, vector<32x32xf32>, vector<8x32xf32> -> vector<8x32xf32>
    %94 = arith.addf %91, %93 : vector<8x32xf32>
    %95 = vector.broadcast %20 : vector<1x32xf32> to vector<8x32xf32>
    %96 = arith.addf %94, %95 : vector<8x32xf32>
    %97 = math.tanh %96 : vector<8x32xf32>
    %cst_58 = arith.constant 1.000000e+00 : f32
    %98 = vector.broadcast %cst_58 : f32 to vector<8x32xf32>
    %99 = arith.subf %98, %77 : vector<8x32xf32>
    %100 = arith.mulf %99, %62 : vector<8x32xf32>
    %101 = arith.mulf %77, %97 : vector<8x32xf32>
    %102 = arith.addf %100, %101 : vector<8x32xf32>
    %103 = arith.truncf %102 : vector<8x32xf32> to vector<8x32xbf16>
    %cst_59 = arith.constant dense<0.000000e+00> : vector<8x32xf32>
    %104 = tpu.matmul %0, %103, %cst_59 {dimension_numbers = #tpu.dot_dimension_numbers<[1], [0], [0], [1], [0, 0, 1, 1], [], []>} : vector<8x8xbf16>, vector<8x32xbf16>, vector<8x32xf32> -> vector<8x32xf32>
    %cst_60 = arith.constant dense<0.000000e+00> : vector<8x32xf32>
    %105 = tpu.matmul %1, %103, %cst_60 {dimension_numbers = #tpu.dot_dimension_numbers<[1], [0], [0], [1], [0, 0, 1, 1], [], []>} : vector<8x8xbf16>, vector<8x32xbf16>, vector<8x32xf32> -> vector<8x32xf32>
    %cst_61 = arith.constant dense<0.000000e+00> : vector<8x32xf32>
    %106 = tpu.matmul %102, %21, %cst_61 {dimension_numbers = #tpu.dot_dimension_numbers<[1], [0], [0], [1], [0, 0, 1, 1], [], []>} : vector<8x32xf32>, vector<32x32xf32>, vector<8x32xf32> -> vector<8x32xf32>
    %cst_62 = arith.constant dense<0.000000e+00> : vector<8x32xf32>
    %107 = tpu.matmul %104, %4, %cst_62 {dimension_numbers = #tpu.dot_dimension_numbers<[1], [0], [0], [1], [0, 0, 1, 1], [], []>} : vector<8x32xf32>, vector<32x32xf32>, vector<8x32xf32> -> vector<8x32xf32>
    %cst_63 = arith.constant dense<0.000000e+00> : vector<8x32xf32>
    %108 = tpu.matmul %105, %10, %cst_63 {dimension_numbers = #tpu.dot_dimension_numbers<[1], [0], [0], [1], [0, 0, 1, 1], [], []>} : vector<8x32xf32>, vector<32x32xf32>, vector<8x32xf32> -> vector<8x32xf32>
    %109 = arith.addf %107, %108 : vector<8x32xf32>
    %110 = arith.addf %109, %106 : vector<8x32xf32>
    %111 = vector.broadcast %16 : vector<1x32xf32> to vector<8x32xf32>
    %112 = arith.addf %110, %111 : vector<8x32xf32>
    %113 = arith.negf %112 : vector<8x32xf32>
    %114 = math.exp %113 : vector<8x32xf32>
    %cst_64 = arith.constant 1.000000e+00 : f32
    %115 = vector.broadcast %cst_64 : f32 to vector<8x32xf32>
    %116 = arith.addf %115, %114 : vector<8x32xf32>
    %117 = arith.divf %115, %116 : vector<8x32xf32>
    %cst_65 = arith.constant dense<0.000000e+00> : vector<8x32xf32>
    %118 = tpu.matmul %104, %6, %cst_65 {dimension_numbers = #tpu.dot_dimension_numbers<[1], [0], [0], [1], [0, 0, 1, 1], [], []>} : vector<8x32xf32>, vector<32x32xf32>, vector<8x32xf32> -> vector<8x32xf32>
    %cst_66 = arith.constant dense<0.000000e+00> : vector<8x32xf32>
    %119 = tpu.matmul %105, %12, %cst_66 {dimension_numbers = #tpu.dot_dimension_numbers<[1], [0], [0], [1], [0, 0, 1, 1], [], []>} : vector<8x32xf32>, vector<32x32xf32>, vector<8x32xf32> -> vector<8x32xf32>
    %120 = arith.addf %118, %119 : vector<8x32xf32>
    %121 = arith.addf %120, %106 : vector<8x32xf32>
    %122 = vector.broadcast %18 : vector<1x32xf32> to vector<8x32xf32>
    %123 = arith.addf %121, %122 : vector<8x32xf32>
    %124 = arith.negf %123 : vector<8x32xf32>
    %125 = math.exp %124 : vector<8x32xf32>
    %cst_67 = arith.constant 1.000000e+00 : f32
    %126 = vector.broadcast %cst_67 : f32 to vector<8x32xf32>
    %127 = arith.addf %126, %125 : vector<8x32xf32>
    %128 = arith.divf %126, %127 : vector<8x32xf32>
    %cst_68 = arith.constant dense<0.000000e+00> : vector<8x32xf32>
    %129 = tpu.matmul %104, %8, %cst_68 {dimension_numbers = #tpu.dot_dimension_numbers<[1], [0], [0], [1], [0, 0, 1, 1], [], []>} : vector<8x32xf32>, vector<32x32xf32>, vector<8x32xf32> -> vector<8x32xf32>
    %cst_69 = arith.constant dense<0.000000e+00> : vector<8x32xf32>
    %130 = tpu.matmul %105, %14, %cst_69 {dimension_numbers = #tpu.dot_dimension_numbers<[1], [0], [0], [1], [0, 0, 1, 1], [], []>} : vector<8x32xf32>, vector<32x32xf32>, vector<8x32xf32> -> vector<8x32xf32>
    %131 = arith.addf %129, %130 : vector<8x32xf32>
    %132 = arith.mulf %128, %102 : vector<8x32xf32>
    %cst_70 = arith.constant dense<0.000000e+00> : vector<8x32xf32>
    %133 = tpu.matmul %132, %22, %cst_70 {dimension_numbers = #tpu.dot_dimension_numbers<[1], [0], [0], [1], [0, 0, 1, 1], [], []>} : vector<8x32xf32>, vector<32x32xf32>, vector<8x32xf32> -> vector<8x32xf32>
    %134 = arith.addf %131, %133 : vector<8x32xf32>
    %135 = vector.broadcast %20 : vector<1x32xf32> to vector<8x32xf32>
    %136 = arith.addf %134, %135 : vector<8x32xf32>
    %137 = math.tanh %136 : vector<8x32xf32>
    %cst_71 = arith.constant 1.000000e+00 : f32
    %138 = vector.broadcast %cst_71 : f32 to vector<8x32xf32>
    %139 = arith.subf %138, %117 : vector<8x32xf32>
    %140 = arith.mulf %139, %102 : vector<8x32xf32>
    %141 = arith.mulf %117, %137 : vector<8x32xf32>
    %142 = arith.addf %140, %141 : vector<8x32xf32>
    %c0_72 = arith.constant 0 : index
    %c0_73 = arith.constant 0 : index
    %143 = vector.load %arg9[%c0_72, %c0_73] : memref<8x32xf32, #tpu.memory_space<vmem>>, vector<8x32xf32>
    tpu.vector_store %arg9[%c0_72, %c0_73], %142 {strides = array<i32>} : memref<8x32xf32, #tpu.memory_space<vmem>>, vector<8x32xf32>,
    return
  }
  func.func @transform_0(%arg0: i32) -> (i32, i32) {
    %c0_i32 = arith.constant 0 : i32
    %c0_i32_0 = arith.constant 0 : i32
    %c0_i32_1 = arith.constant 0 : i32
    return %c0_i32, %c0_i32_0 : i32, i32
  }
  func.func @transform_1(%arg0: i32) -> (i32, i32) {
    %c0_i32 = arith.constant 0 : i32
    %c0_i32_0 = arith.constant 0 : i32
    %c0_i32_1 = arith.constant 0 : i32
    return %c0_i32, %c0_i32_0 : i32, i32
  }
  func.func @transform_2(%arg0: i32) -> (i32, i32) {
    %c0_i32 = arith.constant 0 : i32
    %c0_i32_0 = arith.constant 0 : i32
    return %arg0, %c0_i32 : i32, i32
  }
  func.func @transform_3(%arg0: i32) -> (i32, i32, i32) {
    %c0_i32 = arith.constant 0 : i32
    %c0_i32_0 = arith.constant 0 : i32
    %c0_i32_1 = arith.constant 0 : i32
    %c0_i32_2 = arith.constant 0 : i32
    return %c0_i32, %c0_i32_0, %c0_i32_1 : i32, i32, i32
  }
  func.func @transform_4(%arg0: i32) -> (i32, i32, i32) {
    %c0_i32 = arith.constant 0 : i32
    %c0_i32_0 = arith.constant 0 : i32
    %c0_i32_1 = arith.constant 0 : i32
    %c0_i32_2 = arith.constant 0 : i32
    return %c0_i32, %c0_i32_0, %c0_i32_1 : i32, i32, i32
  }
  func.func @transform_5(%arg0: i32) -> (i32, i32, i32) {
    %c0_i32 = arith.constant 0 : i32
    %c0_i32_0 = arith.constant 0 : i32
    %c0_i32_1 = arith.constant 0 : i32
    %c0_i32_2 = arith.constant 0 : i32
    return %c0_i32, %c0_i32_0, %c0_i32_1 : i32, i32, i32
  }
  func.func @transform_6(%arg0: i32) -> (i32, i32) {
    %c0_i32 = arith.constant 0 : i32
    %c0_i32_0 = arith.constant 0 : i32
    %c0_i32_1 = arith.constant 0 : i32
    return %c0_i32, %c0_i32_0 : i32, i32
  }
  func.func @transform_7(%arg0: i32) -> (i32, i32) {
    %c0_i32 = arith.constant 0 : i32
    %c0_i32_0 = arith.constant 0 : i32
    %c0_i32_1 = arith.constant 0 : i32
    return %c0_i32, %c0_i32_0 : i32, i32
  }
  func.func @transform_8(%arg0: i32) -> (i32, i32) {
    %c0_i32 = arith.constant 0 : i32
    %c0_i32_0 = arith.constant 0 : i32
    return %arg0, %c0_i32 : i32, i32
  }
}

</mosaic_0001>

<llo_original>
// kernel: tpu_custom_call.1
$region0: #{tpu_custom_call.1}
  #allocation0 [shape = 'u32[]', space=smem, size = 0x4, offset = 0x4, fixed_abs, tag = 'smem constant byte address 0x4 - core index']
  #allocation1 [shape = 'u32[72,128]{1,0:T(1,128)}', space=vmem, size = 0x9000, scoped, tag = 'internal scratch']
  %s0 = inlined_call_operand.vmem [shape: bf16[8,8], index: 0, kind: input, shape index: {}]
  %s1 = inlined_call_operand.hbm [shape: bf16[8,8], index: 1, kind: input, shape index: {}]
  %s2 = inlined_call_operand.hbm [shape: f32[16,32], index: 2, kind: input, shape index: {}, may-alias: {2,8}]
  %s3 = inlined_call_operand.hbm [shape: f32[3,32,32], index: 3, kind: input, shape index: {}]
  %s4 = inlined_call_operand.hbm [shape: f32[3,32,32], index: 4, kind: input, shape index: {}]
  %s5 = inlined_call_operand.hbm [shape: f32[3,1,32], index: 5, kind: input, shape index: {}]
  %s6 = inlined_call_operand.vmem [shape: f32[32,32], index: 6, kind: input, shape index: {}]
  %s7 = inlined_call_operand.hbm [shape: f32[32,32], index: 7, kind: input, shape index: {}]
  %s8 = inlined_call_operand.hbm [shape: f32[16,32], index: 8, kind: output, shape index: {}, may-alias: {2,8}]
  %s9 = sld [smem:[#allocation0]]
  $region89: #{tpu_custom_call.1} parent=0
    _
  %s11 = ssub.s32 1, %s9
  %s12 = scalar_select 0, %s11, %s9
  $region1: #{tpu_custom_call.1} parent=0
    #allocation2 [shape = 'u8[2048]{0}', space=vmem, size = 0x800, scoped, tag = 'input window, operand 1, single buffered']
    #allocation3 [shape = 's32[2]{0}', space=sflag, size = 0x8, scoped, tag = 'scoped memory for tpu_custom_call.1']
    #allocation4 [shape = 's32[2]{0}', space=sflag, size = 0x8, scoped, tag = 'scoped memory for tpu_custom_call.1']
    #allocation5 [shape = 'u8[8192]{0}', space=vmem, size = 0x2000, scoped, tag = 'input window, operand 2']
    #allocation6 [shape = 's32[2]{0}', space=sflag, size = 0x8, scoped, tag = 'scoped memory for tpu_custom_call.1']
    #allocation7 [shape = 'u8[49152]{0}', space=vmem, size = 0xc000, scoped, tag = 'input window, operand 3, single buffered']
    #allocation8 [shape = 'u8[49152]{0}', space=vmem, size = 0xc000, scoped, tag = 'input window, operand 4, single buffered']
    #allocation9 [shape = 's32[1]{0}', space=sflag, size = 0x4, scoped, tag = 'scoped memory for tpu_custom_call.1']
    #allocation10 [shape = 'u8[1536]{0}', space=vmem, size = 0x800, scoped, tag = 'input window, operand 5, single buffered']
    #allocation11 [shape = 'u8[16384]{0}', space=vmem, size = 0x4000, scoped, tag = 'input window, operand 7, single buffered']
    #allocation12 [shape = 's32[1]{0}', space=sflag, size = 0x4, scoped, tag = 'scoped memory for tpu_custom_call.1']
    #allocation13 [shape = 'u8[8192]{0}', space=vmem, size = 0x2000, scoped, tag = 'output window, operand 0']
    %13 = vsyncpa [#allocation3], 0
    %14 = vsyncpa [#allocation6], 0
    %s15 = scalar_lea.sflag [#allocation6], 1
    %16 = vsyncpa %s15, 0
    %17 = vsyncpa [#allocation9], 0
    %18 = vsyncpa [#allocation12], 0
    %19 = vsyncpa [#allocation4], 0
    %s20 = scalar_lea.sflag [#allocation4], 1
    %21 = vsyncpa %s20, 0
    loop: start=0, step=1, limit=4
    $region2: #{tpu_custom_call.1} parent=1 // loop_pre_header
      _
    $region3: #{tpu_custom_call.1} parent=1 // loop_header
      %s23 = sphi 0, %s27
      %p24 = scmp.ge.s32.totalorder %s23, 4
      %s31 = sphi 0, %s31
      %s33 = sphi 0, %s31
      %s34 = sphi 0, %s33
      %s48 = sphi 0, %s34
      %s52 = sphi 0, %s52
      %s54 = sphi 0, %s52
      %s55 = sphi 0, %s54
      %s69 = sphi 0, %s55
      %s75 = sphi 0, %s77
      %s78 = sphi 0, %s75
      %s79 = sphi 0, %s78
      %s95 = sphi 0, %s79
      %s99 = sphi 0, %s99
      %s101 = sphi 0, %s99
      %s102 = sphi 0, %s101
      %s116 = sphi 0, %s102
      %s120 = sphi 0, %s120
      %s122 = sphi 0, %s120
      %s123 = sphi 0, %s122
      %s137 = sphi 0, %s123
      %s141 = sphi 0, %s141
      %s143 = sphi 0, %s141
      %s144 = sphi 0, %s143
      %s158 = sphi 0, %s144
      %s162 = sphi 0, %s162
      %s164 = sphi 0, %s162
      %s165 = sphi 0, %s164
      %s179 = sphi 0, %s165
      %s183 = sphi 0, %s183
      %s185 = sphi 0, %s183
      %s186 = sphi 0, %s185
      %s200 = sphi 0, %s186
      %s206 = sphi 0, %s208
      %s209 = sphi 0, %s206
      %s210 = sphi 0, %s209
      %s226 = sphi 0, %s210
    $region4: #{tpu_custom_call.1} parent=1 // loop_header_branch
      %26 = sbr.rel (%p24) target = $region8
    $region5: #{tpu_custom_call.1} parent=1 // loop_body
      %s28 = ssub.s32 %s23, 1
      %s29 = ssub.s32 %s23, 2
      %s30 = sadd.s32 %s23, 1
      %s32 = sadd.s32 %s31, 1
      %p35 = scmp.eq.s32.totalorder %s23, 1
      %p36 = scmp.ne.s32.totalorder %s31, %s33
      %p37 = scmp.eq.s32.totalorder %s23, 0
      %p38 = por %p36, %p37
      %p39 = scmp.ne.s32.totalorder %s31, %s33
      %p40 = scmp.eq.s32.totalorder %s28, 1
      %p41 = por %p39, %p40
      %p42 = scmp.ne.s32.totalorder %s33, %s34
      %p43 = scmp.eq.s32.totalorder %s28, 0
      %p44 = por %p42, %p43
      %p45 = scmp.ne.s32.totalorder %s33, %s34
      %p46 = scmp.eq.s32.totalorder %s29, 1
      %p47 = por %p45, %p46
      %p49 = scmp.ne.s32.totalorder %s34, %s48
      %p50 = scmp.eq.s32.totalorder %s29, 0
      %p51 = por %p49, %p50
      %s53 = sadd.s32 %s52, 1
      %p56 = scmp.eq.s32.totalorder %s23, 1
      %p57 = scmp.ne.s32.totalorder %s52, %s54
      %p58 = scmp.eq.s32.totalorder %s23, 0
      %p59 = por %p57, %p58
      %p60 = scmp.ne.s32.totalorder %s52, %s54
      %p61 = scmp.eq.s32.totalorder %s28, 1
      %p62 = por %p60, %p61
      %p63 = scmp.ne.s32.totalorder %s54, %s55
      %p64 = scmp.eq.s32.totalorder %s28, 0
      %p65 = por %p63, %p64
      %p66 = scmp.ne.s32.totalorder %s54, %s55
      %p67 = scmp.eq.s32.totalorder %s29, 1
      %p68 = por %p66, %p67
      %p70 = scmp.ne.s32.totalorder %s55, %s69
      %p71 = scmp.eq.s32.totalorder %s29, 0
      %p72 = por %p70, %p71
      %s73 = ssub.s32 %s23, %s30
      %p74 = scmp.eq.s32.totalorder %s73, 0
      %s76 = sadd.s32 %s75, 1
      %s77 = scalar_select %p74, %s75, %s76
      %p80 = pneg %p74
      %p81 = scmp.eq.s32.totalorder %s23, 1
      %p82 = por %p80, %p81
      %p83 = scmp.ne.s32.totalorder %s75, %s78
      %p84 = scmp.eq.s32.totalorder %s23, 0
      %p85 = por %p83, %p84
      %p86 = scmp.ne.s32.totalorder %s75, %s78
      %p87 = scmp.eq.s32.totalorder %s28, 1
      %p88 = por %p86, %p87
      %p89 = scmp.ne.s32.totalorder %s78, %s79
      %p90 = scmp.eq.s32.totalorder %s28, 0
      %p91 = por %p89, %p90
      %p92 = scmp.ne.s32.totalorder %s78, %s79
      %p93 = scmp.eq.s32.totalorder %s29, 1
      %p94 = por %p92, %p93
      %p96 = scmp.ne.s32.totalorder %s79, %s95
      %p97 = scmp.eq.s32.totalorder %s29, 0
      %p98 = por %p96, %p97
      %s100 = sadd.s32 %s99, 1
      %p103 = scmp.eq.s32.totalorder %s23, 1
      %p104 = scmp.ne.s32.totalorder %s99, %s101
      %p105 = scmp.eq.s32.totalorder %s23, 0
      %p106 = por %p104, %p105
      %p107 = scmp.ne.s32.totalorder %s99, %s101
      %p108 = scmp.eq.s32.totalorder %s28, 1
      %p109 = por %p107, %p108
      %p110 = scmp.ne.s32.totalorder %s101, %s102
      %p111 = scmp.eq.s32.totalorder %s28, 0
      %p112 = por %p110, %p111
      %p113 = scmp.ne.s32.totalorder %s101, %s102
      %p114 = scmp.eq.s32.totalorder %s29, 1
      %p115 = por %p113, %p114
      %p117 = scmp.ne.s32.totalorder %s102, %s116
      %p118 = scmp.eq.s32.totalorder %s29, 0
      %p119 = por %p117, %p118
      %s121 = sadd.s32 %s120, 1
      %p124 = scmp.eq.s32.totalorder %s23, 1
      %p125 = scmp.ne.s32.totalorder %s120, %s122
      %p126 = scmp.eq.s32.totalorder %s23, 0
      %p127 = por %p125, %p126
      %p128 = scmp.ne.s32.totalorder %s120, %s122
      %p129 = scmp.eq.s32.totalorder %s28, 1
      %p130 = por %p128, %p129
      %p131 = scmp.ne.s32.totalorder %s122, %s123
      %p132 = scmp.eq.s32.totalorder %s28, 0
      %p133 = por %p131, %p132
      %p134 = scmp.ne.s32.totalorder %s122, %s123
      %p135 = scmp.eq.s32.totalorder %s29, 1
      %p136 = por %p134, %p135
      %p138 = scmp.ne.s32.totalorder %s123, %s137
      %p139 = scmp.eq.s32.totalorder %s29, 0
      %p140 = por %p138, %p139
      %s142 = sadd.s32 %s141, 1
      %p145 = scmp.eq.s32.totalorder %s23, 1
      %p146 = scmp.ne.s32.totalorder %s141, %s143
      %p147 = scmp.eq.s32.totalorder %s23, 0
      %p148 = por %p146, %p147
      %p149 = scmp.ne.s32.totalorder %s141, %s143
      %p150 = scmp.eq.s32.totalorder %s28, 1
      %p151 = por %p149, %p150
      %p152 = scmp.ne.s32.totalorder %s143, %s144
      %p153 = scmp.eq.s32.totalorder %s28, 0
      %p154 = por %p152, %p153
      %p155 = scmp.ne.s32.totalorder %s143, %s144
      %p156 = scmp.eq.s32.totalorder %s29, 1
      %p157 = por %p155, %p156
      %p159 = scmp.ne.s32.totalorder %s144, %s158
      %p160 = scmp.eq.s32.totalorder %s29, 0
      %p161 = por %p159, %p160
      %s163 = sadd.s32 %s162, 1
      %p166 = scmp.eq.s32.totalorder %s23, 1
      %p167 = scmp.ne.s32.totalorder %s162, %s164
      %p168 = scmp.eq.s32.totalorder %s23, 0
      %p169 = por %p167, %p168
      %p170 = scmp.ne.s32.totalorder %s162, %s164
      %p171 = scmp.eq.s32.totalorder %s28, 1
      %p172 = por %p170, %p171
      %p173 = scmp.ne.s32.totalorder %s164, %s165
      %p174 = scmp.eq.s32.totalorder %s28, 0
      %p175 = por %p173, %p174
      %p176 = scmp.ne.s32.totalorder %s164, %s165
      %p177 = scmp.eq.s32.totalorder %s29, 1
      %p178 = por %p176, %p177
      %p180 = scmp.ne.s32.totalorder %s165, %s179
      %p181 = scmp.eq.s32.totalorder %s29, 0
      %p182 = por %p180, %p181
      %s184 = sadd.s32 %s183, 1
      %p187 = scmp.eq.s32.totalorder %s23, 1
      %p188 = scmp.ne.s32.totalorder %s183, %s185
      %p189 = scmp.eq.s32.totalorder %s23, 0
      %p190 = por %p188, %p189
      %p191 = scmp.ne.s32.totalorder %s183, %s185
      %p192 = scmp.eq.s32.totalorder %s28, 1
      %p193 = por %p191, %p192
      %p194 = scmp.ne.s32.totalorder %s185, %s186
      %p195 = scmp.eq.s32.totalorder %s28, 0
      %p196 = por %p194, %p195
      %p197 = scmp.ne.s32.totalorder %s185, %s186
      %p198 = scmp.eq.s32.totalorder %s29, 1
      %p199 = por %p197, %p198
      %p201 = scmp.ne.s32.totalorder %s186, %s200
      %p202 = scmp.eq.s32.totalorder %s29, 0
      %p203 = por %p201, %p202
      %s204 = ssub.s32 %s23, %s30
      %p205 = scmp.eq.s32.totalorder %s204, 0
      %s207 = sadd.s32 %s206, 1
      %s208 = scalar_select %p205, %s206, %s207
      %p211 = pneg %p205
      %p212 = scmp.eq.s32.totalorder %s23, 1
      %p213 = por %p211, %p212
      %p214 = scmp.ne.s32.totalorder %s206, %s209
      %p215 = scmp.eq.s32.totalorder %s23, 0
      %p216 = por %p214, %p215
      %p217 = scmp.ne.s32.totalorder %s206, %s209
      %p218 = scmp.eq.s32.totalorder %s28, 1
      %p219 = por %p217, %p218
      %p220 = scmp.ne.s32.totalorder %s209, %s210
      %p221 = scmp.eq.s32.totalorder %s28, 0
      %p222 = por %p220, %p221
      %p223 = scmp.ne.s32.totalorder %s209, %s210
      %p224 = scmp.eq.s32.totalorder %s29, 1
      %p225 = por %p223, %p224
      %p227 = scmp.ne.s32.totalorder %s210, %s226
      %p228 = scmp.eq.s32.totalorder %s29, 0
      %p229 = por %p227, %p228
      %p230 = scmp.le.s32.totalorder 1, %s23
      %p231 = scmp.lt.s32.totalorder %s23, 3
      %p232 = pnand %p230, %p231
      %p233 = pneg %p232
      // Predicated region
      $region9: #{tpu_custom_call.1} parent=5 // pred_check
        _
      $region10: #{tpu_custom_call.1} parent=5 // pred_check_branch
        %235 = sbr.rel (%p232) target = $region12
      $region11: #{tpu_custom_call.1} parent=5 // pred_region
        %s236 = ssub.s32 %s23, 1
        // Predicated region
        $region13: #{tpu_custom_call.1} parent=11 // pred_check
          %p237 = pneg %p44
        $region14: #{tpu_custom_call.1} parent=11 // pred_check_branch
          %239 = sbr.rel (%p237) target = $region16
        $region15: #{tpu_custom_call.1} parent=11 // pred_region
          _
        $region16: #{tpu_custom_call.1} parent=11 // pred_fallthru
          _
        // Predicated region
        $region17: #{tpu_custom_call.1} parent=11 // pred_check
          %p240 = pneg %p65
        $region18: #{tpu_custom_call.1} parent=11 // pred_check_branch
          %242 = sbr.rel (%p240) target = $region20
        $region19: #{tpu_custom_call.1} parent=11 // pred_region
          %244 = vsyncadd [#allocation3], 0
          %s246 = sshll.u32 %s1, 4
          %s247 = int_to_ptr.hbm [resolvable:$true] %s246
          %s248 = sshll.u32 [#allocation2], 4
          %s249 = int_to_ptr.vmem [resolvable:$true] %s248
          %251 = dma.hbm_to_vmem [thread:$0]  %s247, 64, %s249, [#allocation3]
        $region20: #{tpu_custom_call.1} parent=11 // pred_fallthru
          _
        // Predicated region
        $region21: #{tpu_custom_call.1} parent=11 // pred_check
          %p252 = pneg %p112
        $region22: #{tpu_custom_call.1} parent=11 // pred_check_branch
          %254 = sbr.rel (%p252) target = $region24
        $region23: #{tpu_custom_call.1} parent=11 // pred_region
          %256 = vsyncadd [#allocation6], 0
          %s257 = sshll.u32 %s3, 4
          %s258 = int_to_ptr.hbm [resolvable:$true] %s257
          %s259 = sshll.u32 [#allocation7], 4
          %s260 = int_to_ptr.vmem [resolvable:$true] %s259
          %265 = dma.hbm_to_vmem [thread:$0]  %s258, 1536, %s260, [#allocation6], 128, 128, 8
        $region24: #{tpu_custom_call.1} parent=11 // pred_fallthru
          _
        // Predicated region
        $region25: #{tpu_custom_call.1} parent=11 // pred_check
          %p266 = pneg %p133
        $region26: #{tpu_custom_call.1} parent=11 // pred_check_branch
          %268 = sbr.rel (%p266) target = $region28
        $region27: #{tpu_custom_call.1} parent=11 // pred_region
          %270 = vsyncadd [#allocation9], 0
          %s271 = sshll.u32 %s4, 4
          %s272 = int_to_ptr.hbm [resolvable:$true] %s271
          %s273 = sshll.u32 [#allocation8], 4
          %s274 = int_to_ptr.vmem [resolvable:$true] %s273
          %279 = dma.hbm_to_vmem [thread:$0]  %s272, 1536, %s274, [#allocation9], 128, 128, 8
        $region28: #{tpu_custom_call.1} parent=11 // pred_fallthru
          _
        // Predicated region
        $region29: #{tpu_custom_call.1} parent=11 // pred_check
          %p280 = pneg %p154
        $region30: #{tpu_custom_call.1} parent=11 // pred_check_branch
          %282 = sbr.rel (%p280) target = $region32
        $region31: #{tpu_custom_call.1} parent=11 // pred_region
          %284 = vsyncadd [#allocation9], 0
          %s285 = sshll.u32 %s5, 4
          %s286 = int_to_ptr.hbm [resolvable:$true] %s285
          %s287 = sshll.u32 [#allocation10], 4
          %s288 = int_to_ptr.vmem [resolvable:$true] %s287
          %293 = dma.hbm_to_vmem [thread:$0]  %s286, 48, %s288, [#allocation9], 16, 16, 1
        $region32: #{tpu_custom_call.1} parent=11 // pred_fallthru
          _
        // Predicated region
        $region33: #{tpu_custom_call.1} parent=11 // pred_check
          %p294 = pneg %p175
        $region34: #{tpu_custom_call.1} parent=11 // pred_check_branch
          %296 = sbr.rel (%p294) target = $region36
        $region35: #{tpu_custom_call.1} parent=11 // pred_region
          _
        $region36: #{tpu_custom_call.1} parent=11 // pred_fallthru
          _
        // Predicated region
        $region37: #{tpu_custom_call.1} parent=11 // pred_check
          %p297 = pneg %p196
        $region38: #{tpu_custom_call.1} parent=11 // pred_check_branch
          %299 = sbr.rel (%p297) target = $region40
        $region39: #{tpu_custom_call.1} parent=11 // pred_region
          %301 = vsyncadd [#allocation12], 0
          %s302 = sshll.u32 %s7, 4
          %s303 = int_to_ptr.hbm [resolvable:$true] %s302
          %s304 = sshll.u32 [#allocation11], 4
          %s305 = int_to_ptr.vmem [resolvable:$true] %s304
          %310 = dma.hbm_to_vmem [thread:$0]  %s303, 512, %s305, [#allocation12], 128, 128, 8
        $region40: #{tpu_custom_call.1} parent=11 // pred_fallthru
          _
      $region12: #{tpu_custom_call.1} parent=5 // pred_fallthru
        _
      %p311 = scmp.lt.s32.totalorder %s23, 2
      // Predicated region
      $region41: #{tpu_custom_call.1} parent=5 // pred_check
        %p312 = pneg %p311
      $region42: #{tpu_custom_call.1} parent=5 // pred_check_branch
        %314 = sbr.rel (%p312) target = $region44
      $region43: #{tpu_custom_call.1} parent=5 // pred_region
        // Predicated region
        $region45: #{tpu_custom_call.1} parent=43 // pred_check
          %p315 = pneg %p85
        $region46: #{tpu_custom_call.1} parent=43 // pred_check_branch
          %317 = sbr.rel (%p315) target = $region48
        $region47: #{tpu_custom_call.1} parent=43 // pred_region
          %s318 = sand.u32 %s23, 1
          %s319 = scalar_lea.sflag [#allocation6], %s318
          %s320 = sand.u32 %s75, 1
          %s321 = smul.addr %s320, 8
          %s322 = scalar_lea.vmem [#allocation5], %s321
          %324 = vsyncadd %s319, 0
          %s325 = smul.addr %s23, 8
          %s326 = scalar_lea.hbm %s2, %s325
          %s328 = sshll.u32 %s326, 4
          %s329 = int_to_ptr.hbm [resolvable:$true] %s328
          %s330 = sshll.u32 %s322, 4
          %s331 = int_to_ptr.vmem [resolvable:$true] %s330
          %333 = dma.hbm_to_vmem [thread:$0]  %s329, 128, %s331, %s319
        $region48: #{tpu_custom_call.1} parent=43 // pred_fallthru
          _
      $region44: #{tpu_custom_call.1} parent=5 // pred_fallthru
        _
      %p334 = scmp.le.s32.totalorder 1, %s23
      %p335 = scmp.lt.s32.totalorder %s23, 3
      %p336 = pnand %p334, %p335
      %p337 = pneg %p336
      // Predicated region
      $region49: #{tpu_custom_call.1} parent=5 // pred_check
        _
      $region50: #{tpu_custom_call.1} parent=5 // pred_check_branch
        %339 = sbr.rel (%p336) target = $region52
      $region51: #{tpu_custom_call.1} parent=5 // pred_region
        %s340 = ssub.s32 %s23, 1
        // Predicated region
        $region53: #{tpu_custom_call.1} parent=51 // pred_check
          %p341 = pneg %p65
        $region54: #{tpu_custom_call.1} parent=51 // pred_check_branch
          %343 = sbr.rel (%p341) target = $region56
        $region55: #{tpu_custom_call.1} parent=51 // pred_region
          %345 = dma.done [#allocation3], 64
        $region56: #{tpu_custom_call.1} parent=51 // pred_fallthru
          _
        %s346 = sand.u32 %s28, 1
        %s347 = scalar_lea.sflag [#allocation6], %s346
        %s348 = sand.u32 %s78, 1
        %s349 = smul.addr %s348, 8
        %s350 = scalar_lea.vmem [#allocation5], %s349
        // Predicated region
        $region57: #{tpu_custom_call.1} parent=51 // pred_check
          %p351 = pneg %p91
        $region58: #{tpu_custom_call.1} parent=51 // pred_check_branch
          %353 = sbr.rel (%p351) target = $region60
        $region59: #{tpu_custom_call.1} parent=51 // pred_region
          %355 = dma.done %s347, 128
        $region60: #{tpu_custom_call.1} parent=51 // pred_fallthru
          _
        // Predicated region
        $region61: #{tpu_custom_call.1} parent=51 // pred_check
          %p356 = pneg %p112
        $region62: #{tpu_custom_call.1} parent=51 // pred_check_branch
          %358 = sbr.rel (%p356) target = $region64
        $region63: #{tpu_custom_call.1} parent=51 // pred_region
          %360 = dma.done [#allocation6], 1536
        $region64: #{tpu_custom_call.1} parent=51 // pred_fallthru
          _
        // Predicated region
        $region65: #{tpu_custom_call.1} parent=51 // pred_check
          %p361 = pneg %p133
        $region66: #{tpu_custom_call.1} parent=51 // pred_check_branch
          %363 = sbr.rel (%p361) target = $region68
        $region67: #{tpu_custom_call.1} parent=51 // pred_region
          %365 = dma.done [#allocation9], 1536
        $region68: #{tpu_custom_call.1} parent=51 // pred_fallthru
          _
        // Predicated region
        $region69: #{tpu_custom_call.1} parent=51 // pred_check
          %p366 = pneg %p154
        $region70: #{tpu_custom_call.1} parent=51 // pred_check_branch
          %368 = sbr.rel (%p366) target = $region72
        $region71: #{tpu_custom_call.1} parent=51 // pred_region
          %370 = dma.done [#allocation9], 48
        $region72: #{tpu_custom_call.1} parent=51 // pred_fallthru
          _
        // Predicated region
        $region73: #{tpu_custom_call.1} parent=51 // pred_check
          %p371 = pneg %p196
        $region74: #{tpu_custom_call.1} parent=51 // pred_check_branch
          %373 = sbr.rel (%p371) target = $region76
        $region75: #{tpu_custom_call.1} parent=51 // pred_region
          %375 = dma.done [#allocation12], 512
        $region76: #{tpu_custom_call.1} parent=51 // pred_fallthru
          _
        %p376 = pneg %p44
        %p377 = pneg %p41
        %p378 = pneg %p65
        %p379 = pneg %p62
        %s380 = sand.u32 %s28, 1
        %s381 = scalar_lea.sflag [#allocation6], %s380
        %s382 = sand.u32 %s78, 1
        %s383 = smul.addr %s382, 8
        %s384 = scalar_lea.vmem [#allocation5], %s383
        %p385 = pneg %p91
        %p386 = pneg %p88
        %p387 = pneg %p112
        %p388 = pneg %p109
        %p389 = pneg %p133
        %p390 = pneg %p130
        %p391 = pneg %p154
        %p392 = pneg %p151
        %p393 = pneg %p175
        %p394 = pneg %p172
        %p395 = pneg %p196
        %p396 = pneg %p193
        %p397 = pneg %p222
        %p398 = pneg %p219
        %s399 = sand.u32 %s209, 1
        %s400 = scalar_lea.sflag [#allocation4], %s399
        %s401 = sand.u32 %s209, 1
        %s402 = smul.addr %s401, 8
        %s403 = scalar_lea.vmem [#allocation13], %s402
        %v405 = vld [vmem:[%s0] sm:$0xf]
        %v406 = vld [vmem:[#allocation2] sm:$0xf]
        %v407 = vld [vmem:[%s350] sm:$0xff]
        %v408 = vld [vmem:[#allocation7] sm:$0xff]
        %v409 = vld [vmem:[#allocation7 + $0x8] sm:$0xff]
        %v410 = vld [vmem:[#allocation7 + $0x10] sm:$0xff]
        %v411 = vld [vmem:[#allocation7 + $0x18] sm:$0xff]
        %s412 = scalar_lea.vmem [#allocation7], 32
        %v413 = vld [vmem:[%s412] sm:$0xff]
        %v414 = vld [vmem:[%s412 + $0x8] sm:$0xff]
        %v415 = vld [vmem:[%s412 + $0x10] sm:$0xff]
        %v416 = vld [vmem:[%s412 + $0x18] sm:$0xff]
        %s417 = scalar_lea.vmem [#allocation7], 64
        %v418 = vld [vmem:[%s417] sm:$0xff]
        %v419 = vld [vmem:[%s417 + $0x8] sm:$0xff]
        %v420 = vld [vmem:[%s417 + $0x10] sm:$0xff]
        %v421 = vld [vmem:[%s417 + $0x18] sm:$0xff]
        %v422 = vld [vmem:[#allocation8] sm:$0xff]
        %v423 = vld [vmem:[#allocation8 + $0x8] sm:$0xff]
        %v424 = vld [vmem:[#allocation8 + $0x10] sm:$0xff]
        %v425 = vld [vmem:[#allocation8 + $0x18] sm:$0xff]
        %s426 = scalar_lea.vmem [#allocation8], 32
        %v427 = vld [vmem:[%s426] sm:$0xff]
        %v428 = vld [vmem:[%s426 + $0x8] sm:$0xff]
        %v429 = vld [vmem:[%s426 + $0x10] sm:$0xff]
        %v430 = vld [vmem:[%s426 + $0x18] sm:$0xff]
        %s431 = scalar_lea.vmem [#allocation8], 64
        %v432 = vld [vmem:[%s431] sm:$0xff]
        %v433 = vld [vmem:[%s431 + $0x8] sm:$0xff]
        %v434 = vld [vmem:[%s431 + $0x10] sm:$0xff]
        %v435 = vld [vmem:[%s431 + $0x18] sm:$0xff]
        %v436 = vld [vmem:[#allocation10] sm:$0x1]
        %s437 = scalar_lea.vmem [#allocation10], 1
        %v438 = vld [vmem:[%s437] sm:$0x1]
        %s439 = scalar_lea.vmem [#allocation10], 2
        %v440 = vld [vmem:[%s439] sm:$0x1]
        %v441 = vld [vmem:[%s6] sm:$0xff]
        %v442 = vld [vmem:[%s6 + $0x8] sm:$0xff]
        %v443 = vld [vmem:[%s6 + $0x10] sm:$0xff]
        %v444 = vld [vmem:[%s6 + $0x18] sm:$0xff]
        %v445 = vld [vmem:[#allocation11] sm:$0xff]
        %v446 = vld [vmem:[#allocation11 + $0x8] sm:$0xff]
        %v447 = vld [vmem:[#allocation11 + $0x10] sm:$0xff]
        %v448 = vld [vmem:[#allocation11 + $0x18] sm:$0xff]
        %v449 = vpack.c.bf16 %v407, %v407
        %vm450 = vcmask 64512
        %v452 = vsel %vm450, %v405, 0
        %vm454 = vcmask 1043456
        %v456 = vsel %vm454, %v449, 0
        %458 = vmatpush.bf16.msra.mxu0 0
        %459 = vmatpush.bf16.msra.mxu0 0
        %460 = vmatpush.bf16.msra.mxu0 0
        %461 = vmatpush.bf16.msra.mxu0 0
        %462 = vmatpush.bf16.msra.mxu0 0
        %463 = vmatpush.bf16.msra.mxu0 0
        %464 = vmatpush.bf16.msra.mxu0 0
        %465 = vmatpush.bf16.msra.mxu0 %v456
        %466 = vmatmul.bf16.gmra.mxu0 %v452
        %v467 = vpop.f32.mrf.mxu0
        %v468 = vadd.f32 0.0, %v467
        %v469 = vpop.f32.mrf.mxu0
        %470 = vdwg.mxu0
        %v472 = vsel %vm450, %v406, 0
        %474 = vmatpush.bf16.msra.mxu0 0
        %475 = vmatpush.bf16.msra.mxu0 0
        %476 = vmatpush.bf16.msra.mxu0 0
        %477 = vmatpush.bf16.msra.mxu0 0
        %478 = vmatpush.bf16.msra.mxu0 0
        %479 = vmatpush.bf16.msra.mxu0 0
        %480 = vmatpush.bf16.msra.mxu0 0
        %481 = vmatpush.bf16.msra.mxu0 %v456
        %482 = vmatmul.bf16.gmra.mxu0 %v472
        %v483 = vpop.f32.mrf.mxu0
        %v484 = vadd.f32 0.0, %v483
        %v485 = vpop.f32.mrf.mxu0
        %486 = vdwg.mxu0
        %vm487 = vcmask 261120
        %v489 = vsel %vm487, %v407, 0
        %491 = vmatpush.msra.mxu0 0.0
        %492 = vmatpush.msra.mxu0 0.0
        %493 = vmatpush.msra.mxu0 0.0
        %494 = vmatpush.msra.mxu0 0.0
        %495 = vmatpush.msra.mxu0 0.0
        %496 = vmatpush.msra.mxu0 0.0
        %497 = vmatpush.msra.mxu0 0.0
        %498 = vmatpush.msra.mxu0 0.0
        %499 = vmatpush.msra.mxu0 0.0
        %500 = vmatpush.msra.mxu0 0.0
        %501 = vmatpush.msra.mxu0 0.0
        %502 = vmatpush.msra.mxu0 0.0
        %503 = vmatpush.msra.mxu0 %v444
        %504 = vmatpush.msra.mxu0 %v443
        %505 = vmatpush.msra.mxu0 %v442
        %506 = vmatpush.msra.mxu0 %v441
        %507 = vmatmul.f32.gmra.mxu0 %v489
        %v508 = vpop.f32.mrf.mxu0
        %v509 = vadd.f32 0.0, %v508
        %510 = vdwg.mxu0
        %v512 = vsel %vm487, %v484, 0
        %514 = vmatpush.msra.mxu0 0.0
        %515 = vmatpush.msra.mxu0 0.0
        %516 = vmatpush.msra.mxu0 0.0
        %517 = vmatpush.msra.mxu0 0.0
        %518 = vmatpush.msra.mxu0 0.0
        %519 = vmatpush.msra.mxu0 0.0
        %520 = vmatpush.msra.mxu0 0.0
        %521 = vmatpush.msra.mxu0 0.0
        %522 = vmatpush.msra.mxu0 0.0
        %523 = vmatpush.msra.mxu0 0.0
        %524 = vmatpush.msra.mxu0 0.0
        %525 = vmatpush.msra.mxu0 0.0
        %526 = vmatpush.msra.mxu0 %v425
        %527 = vmatpush.msra.mxu0 %v424
        %528 = vmatpush.msra.mxu0 %v423
        %529 = vmatpush.msra.mxu0 %v422
        %530 = vmatmul.f32.gmra.mxu0 %v512
        %v531 = vpop.f32.mrf.mxu0
        %v532 = vadd.f32 0.0, %v531
        %533 = vdwg.mxu0
        %v535 = vsel %vm487, %v468, 0
        %537 = vmatpush.msra.mxu0 0.0
        %538 = vmatpush.msra.mxu0 0.0
        %539 = vmatpush.msra.mxu0 0.0
        %540 = vmatpush.msra.mxu0 0.0
        %541 = vmatpush.msra.mxu0 0.0
        %542 = vmatpush.msra.mxu0 0.0
        %543 = vmatpush.msra.mxu0 0.0
        %544 = vmatpush.msra.mxu0 0.0
        %545 = vmatpush.msra.mxu0 0.0
        %546 = vmatpush.msra.mxu0 0.0
        %547 = vmatpush.msra.mxu0 0.0
        %548 = vmatpush.msra.mxu0 0.0
        %549 = vmatpush.msra.mxu0 %v411
        %550 = vmatpush.msra.mxu0 %v410
        %551 = vmatpush.msra.mxu0 %v409
        %552 = vmatpush.msra.mxu0 %v408
        %553 = vmatmul.f32.gmra.mxu0 %v535
        %v554 = vpop.f32.mrf.mxu0
        %v555 = vadd.f32 %v532, %v554
        %556 = vdwg.mxu0
        %v557 = vadd.f32 %v555, %v509
        %v559 = vperm.slane %v436, 0
        %v561 = vadd.f32 %v557, %v559
        %v562 = vxor.u32 %v561, 2147483648
        %v563 = vmul.f32 %v562, 1.442695
        %v564 = vpow.pop %v563
        %v565 = vadd.f32 %v564, 1.0
        %v566 = vrcp.pop %v565
        %v567 = vmul.f32 %v565, %v566
        %v568 = vsub.f32 1.0, %v567
        %v569 = vmul.f32 %v566, %v568
        %v570 = vadd.f32 %v566, %v569
        %vm571 = vweird.f32 %v565
        %vm572 = vweird.f32 %v566
        %vm573 = vmor %vm571, %vm572
        %v574 = vsel %vm573, %v566, %v570
        %v575 = vand.u32 2147483647, %v565
        %vm576 = vcmp.eq.f32.partialorder %v575, 8.507059e+37
        %v577 = vand.u32 %v565, 2147483648
        %v578 = vor.u32 1.1754944e-38, %v577
        %v579 = vsel %vm576, %v578, %v574
        %v580 = vmul.f32 1.0, %v579
        %581 = vmatpush.msra.mxu0 0.0
        %582 = vmatpush.msra.mxu0 0.0
        %583 = vmatpush.msra.mxu0 0.0
        %584 = vmatpush.msra.mxu0 0.0
        %585 = vmatpush.msra.mxu0 0.0
        %586 = vmatpush.msra.mxu0 0.0
        %587 = vmatpush.msra.mxu0 0.0
        %588 = vmatpush.msra.mxu0 0.0
        %589 = vmatpush.msra.mxu0 0.0
        %590 = vmatpush.msra.mxu0 0.0
        %591 = vmatpush.msra.mxu0 0.0
        %592 = vmatpush.msra.mxu0 0.0
        %593 = vmatpush.msra.mxu0 %v430
        %594 = vmatpush.msra.mxu0 %v429
        %595 = vmatpush.msra.mxu0 %v428
        %596 = vmatpush.msra.mxu0 %v427
        %597 = vmatmul.f32.gmra.mxu0 %v512
        %v598 = vpop.f32.mrf.mxu0
        %v599 = vadd.f32 0.0, %v598
        %600 = vdwg.mxu0
        %601 = vmatpush.msra.mxu0 0.0
        %602 = vmatpush.msra.mxu0 0.0
        %603 = vmatpush.msra.mxu0 0.0
        %604 = vmatpush.msra.mxu0 0.0
        %605 = vmatpush.msra.mxu0 0.0
        %606 = vmatpush.msra.mxu0 0.0
        %607 = vmatpush.msra.mxu0 0.0
        %608 = vmatpush.msra.mxu0 0.0
        %609 = vmatpush.msra.mxu0 0.0
        %610 = vmatpush.msra.mxu0 0.0
        %611 = vmatpush.msra.mxu0 0.0
        %612 = vmatpush.msra.mxu0 0.0
        %613 = vmatpush.msra.mxu0 %v416
        %614 = vmatpush.msra.mxu0 %v415
        %615 = vmatpush.msra.mxu0 %v414
        %616 = vmatpush.msra.mxu0 %v413
        %617 = vmatmul.f32.gmra.mxu0 %v535
        %v618 = vpop.f32.mrf.mxu0
        %v619 = vadd.f32 %v599, %v618
        %620 = vdwg.mxu0
        %v621 = vadd.f32 %v619, %v509
        %v623 = vperm.slane %v438, 0
        %v625 = vadd.f32 %v621, %v623
        %v626 = vxor.u32 %v625, 2147483648
        %v627 = vmul.f32 %v626, 1.442695
        %v628 = vpow.pop %v627
        %v629 = vadd.f32 %v628, 1.0
        %v630 = vrcp.pop %v629
        %v631 = vmul.f32 %v629, %v630
        %v632 = vsub.f32 1.0, %v631
        %v633 = vmul.f32 %v630, %v632
        %v634 = vadd.f32 %v630, %v633
        %vm635 = vweird.f32 %v629
        %vm636 = vweird.f32 %v630
        %vm637 = vmor %vm635, %vm636
        %v638 = vsel %vm637, %v630, %v634
        %v639 = vand.u32 2147483647, %v629
        %vm640 = vcmp.eq.f32.partialorder %v639, 8.507059e+37
        %v641 = vand.u32 %v629, 2147483648
        %v642 = vor.u32 1.1754944e-38, %v641
        %v643 = vsel %vm640, %v642, %v638
        %v644 = vmul.f32 1.0, %v643
        %645 = vmatpush.msra.mxu0 0.0
        %646 = vmatpush.msra.mxu0 0.0
        %647 = vmatpush.msra.mxu0 0.0
        %648 = vmatpush.msra.mxu0 0.0
        %649 = vmatpush.msra.mxu0 0.0
        %650 = vmatpush.msra.mxu0 0.0
        %651 = vmatpush.msra.mxu0 0.0
        %652 = vmatpush.msra.mxu0 0.0
        %653 = vmatpush.msra.mxu0 0.0
        %654 = vmatpush.msra.mxu0 0.0
        %655 = vmatpush.msra.mxu0 0.0
        %656 = vmatpush.msra.mxu0 0.0
        %657 = vmatpush.msra.mxu0 %v435
        %658 = vmatpush.msra.mxu0 %v434
        %659 = vmatpush.msra.mxu0 %v433
        %660 = vmatpush.msra.mxu0 %v432
        %661 = vmatmul.f32.gmra.mxu0 %v512
        %v662 = vpop.f32.mrf.mxu0
        %v663 = vadd.f32 0.0, %v662
        %664 = vdwg.mxu0
        %665 = vmatpush.msra.mxu0 0.0
        %666 = vmatpush.msra.mxu0 0.0
        %667 = vmatpush.msra.mxu0 0.0
        %668 = vmatpush.msra.mxu0 0.0
        %669 = vmatpush.msra.mxu0 0.0
        %670 = vmatpush.msra.mxu0 0.0
        %671 = vmatpush.msra.mxu0 0.0
        %672 = vmatpush.msra.mxu0 0.0
        %673 = vmatpush.msra.mxu0 0.0
        %674 = vmatpush.msra.mxu0 0.0
        %675 = vmatpush.msra.mxu0 0.0
        %676 = vmatpush.msra.mxu0 0.0
        %677 = vmatpush.msra.mxu0 %v421
        %678 = vmatpush.msra.mxu0 %v420
        %679 = vmatpush.msra.mxu0 %v419
        %680 = vmatpush.msra.mxu0 %v418
        %681 = vmatmul.f32.gmra.mxu0 %v535
        %v682 = vpop.f32.mrf.mxu0
        %v683 = vadd.f32 %v663, %v682
        %684 = vdwg.mxu0
        %v685 = vmul.f32 %v644, %v407
        %v687 = vsel %vm487, %v685, 0
        %689 = vmatpush.msra.mxu0 0.0
        %690 = vmatpush.msra.mxu0 0.0
        %691 = vmatpush.msra.mxu0 0.0
        %692 = vmatpush.msra.mxu0 0.0
        %693 = vmatpush.msra.mxu0 0.0
        %694 = vmatpush.msra.mxu0 0.0
        %695 = vmatpush.msra.mxu0 0.0
        %696 = vmatpush.msra.mxu0 0.0
        %697 = vmatpush.msra.mxu0 0.0
        %698 = vmatpush.msra.mxu0 0.0
        %699 = vmatpush.msra.mxu0 0.0
        %700 = vmatpush.msra.mxu0 0.0
        %701 = vmatpush.msra.mxu0 %v448
        %702 = vmatpush.msra.mxu0 %v447
        %703 = vmatpush.msra.mxu0 %v446
        %704 = vmatpush.msra.mxu0 %v445
        %705 = vmatmul.f32.gmra.mxu0 %v687
        %v706 = vpop.f32.mrf.mxu0
        %v707 = vadd.f32 0.0, %v706
        %708 = vdwg.mxu0
        %v709 = vadd.f32 %v683, %v707
        %v711 = vperm.slane %v440, 0
        %v713 = vadd.f32 %v709, %v711
        %v714 = vtanh.pop %v713
        %v715 = vsub.f32 1.0, %v580
        %v716 = vmul.f32 %v715, %v407
        %v717 = vmul.f32 %v580, %v714
        %v718 = vadd.f32 %v716, %v717
        %v719 = vpack.c.bf16 %v718, %v718
        %v721 = vsel %vm454, %v719, 0
        %723 = vmatpush.bf16.msra.mxu0 0
        %724 = vmatpush.bf16.msra.mxu0 0
        %725 = vmatpush.bf16.msra.mxu0 0
        %726 = vmatpush.bf16.msra.mxu0 0
        %727 = vmatpush.bf16.msra.mxu0 0
        %728 = vmatpush.bf16.msra.mxu0 0
        %729 = vmatpush.bf16.msra.mxu0 0
        %730 = vmatpush.bf16.msra.mxu0 %v721
        %731 = vmatmul.bf16.gmra.mxu0 %v452
        %v732 = vpop.f32.mrf.mxu0
        %v733 = vadd.f32 0.0, %v732
        %v734 = vpop.f32.mrf.mxu0
        %735 = vdwg.mxu0
        %736 = vmatpush.bf16.msra.mxu0 0
        %737 = vmatpush.bf16.msra.mxu0 0
        %738 = vmatpush.bf16.msra.mxu0 0
        %739 = vmatpush.bf16.msra.mxu0 0
        %740 = vmatpush.bf16.msra.mxu0 0
        %741 = vmatpush.bf16.msra.mxu0 0
        %742 = vmatpush.bf16.msra.mxu0 0
        %743 = vmatpush.bf16.msra.mxu0 %v721
        %744 = vmatmul.bf16.gmra.mxu0 %v472
        %v745 = vpop.f32.mrf.mxu0
        %v746 = vadd.f32 0.0, %v745
        %v747 = vpop.f32.mrf.mxu0
        %748 = vdwg.mxu0
        %v750 = vsel %vm487, %v718, 0
        %752 = vmatpush.msra.mxu0 0.0
        %753 = vmatpush.msra.mxu0 0.0
        %754 = vmatpush.msra.mxu0 0.0
        %755 = vmatpush.msra.mxu0 0.0
        %756 = vmatpush.msra.mxu0 0.0
        %757 = vmatpush.msra.mxu0 0.0
        %758 = vmatpush.msra.mxu0 0.0
        %759 = vmatpush.msra.mxu0 0.0
        %760 = vmatpush.msra.mxu0 0.0
        %761 = vmatpush.msra.mxu0 0.0
        %762 = vmatpush.msra.mxu0 0.0
        %763 = vmatpush.msra.mxu0 0.0
        %764 = vmatpush.msra.mxu0 %v444
        %765 = vmatpush.msra.mxu0 %v443
        %766 = vmatpush.msra.mxu0 %v442
        %767 = vmatpush.msra.mxu0 %v441
        %768 = vmatmul.f32.gmra.mxu0 %v750
        %v769 = vpop.f32.mrf.mxu0
        %v770 = vadd.f32 0.0, %v769
        %771 = vdwg.mxu0
        %v773 = vsel %vm487, %v746, 0
        %775 = vmatpush.msra.mxu0 0.0
        %776 = vmatpush.msra.mxu0 0.0
        %777 = vmatpush.msra.mxu0 0.0
        %778 = vmatpush.msra.mxu0 0.0
        %779 = vmatpush.msra.mxu0 0.0
        %780 = vmatpush.msra.mxu0 0.0
        %781 = vmatpush.msra.mxu0 0.0
        %782 = vmatpush.msra.mxu0 0.0
        %783 = vmatpush.msra.mxu0 0.0
        %784 = vmatpush.msra.mxu0 0.0
        %785 = vmatpush.msra.mxu0 0.0
        %786 = vmatpush.msra.mxu0 0.0
        %787 = vmatpush.msra.mxu0 %v425
        %788 = vmatpush.msra.mxu0 %v424
        %789 = vmatpush.msra.mxu0 %v423
        %790 = vmatpush.msra.mxu0 %v422
        %791 = vmatmul.f32.gmra.mxu0 %v773
        %v792 = vpop.f32.mrf.mxu0
        %v793 = vadd.f32 0.0, %v792
        %794 = vdwg.mxu0
        %v796 = vsel %vm487, %v733, 0
        %798 = vmatpush.msra.mxu0 0.0
        %799 = vmatpush.msra.mxu0 0.0
        %800 = vmatpush.msra.mxu0 0.0
        %801 = vmatpush.msra.mxu0 0.0
        %802 = vmatpush.msra.mxu0 0.0
        %803 = vmatpush.msra.mxu0 0.0
        %804 = vmatpush.msra.mxu0 0.0
        %805 = vmatpush.msra.mxu0 0.0
        %806 = vmatpush.msra.mxu0 0.0
        %807 = vmatpush.msra.mxu0 0.0
        %808 = vmatpush.msra.mxu0 0.0
        %809 = vmatpush.msra.mxu0 0.0
        %810 = vmatpush.msra.mxu0 %v411
        %811 = vmatpush.msra.mxu0 %v410
        %812 = vmatpush.msra.mxu0 %v409
        %813 = vmatpush.msra.mxu0 %v408
        %814 = vmatmul.f32.gmra.mxu0 %v796
        %v815 = vpop.f32.mrf.mxu0
        %v816 = vadd.f32 %v793, %v815
        %817 = vdwg.mxu0
        %v818 = vadd.f32 %v816, %v770
        %v819 = vadd.f32 %v818, %v559
        %v820 = vxor.u32 %v819, 2147483648
        %v821 = vmul.f32 %v820, 1.442695
        %v822 = vpow.pop %v821
        %v823 = vadd.f32 %v822, 1.0
        %v824 = vrcp.pop %v823
        %v825 = vmul.f32 %v823, %v824
        %v826 = vsub.f32 1.0, %v825
        %v827 = vmul.f32 %v824, %v826
        %v828 = vadd.f32 %v824, %v827
        %vm829 = vweird.f32 %v823
        %vm830 = vweird.f32 %v824
        %vm831 = vmor %vm829, %vm830
        %v832 = vsel %vm831, %v824, %v828
        %v833 = vand.u32 2147483647, %v823
        %vm834 = vcmp.eq.f32.partialorder %v833, 8.507059e+37
        %v835 = vand.u32 %v823, 2147483648
        %v836 = vor.u32 1.1754944e-38, %v835
        %v837 = vsel %vm834, %v836, %v832
        %v838 = vmul.f32 1.0, %v837
        %839 = vmatpush.msra.mxu0 0.0
        %840 = vmatpush.msra.mxu0 0.0
        %841 = vmatpush.msra.mxu0 0.0
        %842 = vmatpush.msra.mxu0 0.0
        %843 = vmatpush.msra.mxu0 0.0
        %844 = vmatpush.msra.mxu0 0.0
        %845 = vmatpush.msra.mxu0 0.0
        %846 = vmatpush.msra.mxu0 0.0
        %847 = vmatpush.msra.mxu0 0.0
        %848 = vmatpush.msra.mxu0 0.0
        %849 = vmatpush.msra.mxu0 0.0
        %850 = vmatpush.msra.mxu0 0.0
        %851 = vmatpush.msra.mxu0 %v430
        %852 = vmatpush.msra.mxu0 %v429
        %853 = vmatpush.msra.mxu0 %v428
        %854 = vmatpush.msra.mxu0 %v427
        %855 = vmatmul.f32.gmra.mxu0 %v773
        %v856 = vpop.f32.mrf.mxu0
        %v857 = vadd.f32 0.0, %v856
        %858 = vdwg.mxu0
        %859 = vmatpush.msra.mxu0 0.0
        %860 = vmatpush.msra.mxu0 0.0
        %861 = vmatpush.msra.mxu0 0.0
        %862 = vmatpush.msra.mxu0 0.0
        %863 = vmatpush.msra.mxu0 0.0
        %864 = vmatpush.msra.mxu0 0.0
        %865 = vmatpush.msra.mxu0 0.0
        %866 = vmatpush.msra.mxu0 0.0
        %867 = vmatpush.msra.mxu0 0.0
        %868 = vmatpush.msra.mxu0 0.0
        %869 = vmatpush.msra.mxu0 0.0
        %870 = vmatpush.msra.mxu0 0.0
        %871 = vmatpush.msra.mxu0 %v416
        %872 = vmatpush.msra.mxu0 %v415
        %873 = vmatpush.msra.mxu0 %v414
        %874 = vmatpush.msra.mxu0 %v413
        %875 = vmatmul.f32.gmra.mxu0 %v796
        %v876 = vpop.f32.mrf.mxu0
        %v877 = vadd.f32 %v857, %v876
        %878 = vdwg.mxu0
        %v879 = vadd.f32 %v877, %v770
        %v880 = vadd.f32 %v879, %v623
        %v881 = vxor.u32 %v880, 2147483648
        %v882 = vmul.f32 %v881, 1.442695
        %v883 = vpow.pop %v882
        %v884 = vadd.f32 %v883, 1.0
        %v885 = vrcp.pop %v884
        %v886 = vmul.f32 %v884, %v885
        %v887 = vsub.f32 1.0, %v886
        %v888 = vmul.f32 %v885, %v887
        %v889 = vadd.f32 %v885, %v888
        %vm890 = vweird.f32 %v884
        %vm891 = vweird.f32 %v885
        %vm892 = vmor %vm890, %vm891
        %v893 = vsel %vm892, %v885, %v889
        %v894 = vand.u32 2147483647, %v884
        %vm895 = vcmp.eq.f32.partialorder %v894, 8.507059e+37
        %v896 = vand.u32 %v884, 2147483648
        %v897 = vor.u32 1.1754944e-38, %v896
        %v898 = vsel %vm895, %v897, %v893
        %v899 = vmul.f32 1.0, %v898
        %900 = vmatpush.msra.mxu0 0.0
        %901 = vmatpush.msra.mxu0 0.0
        %902 = vmatpush.msra.mxu0 0.0
        %903 = vmatpush.msra.mxu0 0.0
        %904 = vmatpush.msra.mxu0 0.0
        %905 = vmatpush.msra.mxu0 0.0
        %906 = vmatpush.msra.mxu0 0.0
        %907 = vmatpush.msra.mxu0 0.0
        %908 = vmatpush.msra.mxu0 0.0
        %909 = vmatpush.msra.mxu0 0.0
        %910 = vmatpush.msra.mxu0 0.0
        %911 = vmatpush.msra.mxu0 0.0
        %912 = vmatpush.msra.mxu0 %v435
        %913 = vmatpush.msra.mxu0 %v434
        %914 = vmatpush.msra.mxu0 %v433
        %915 = vmatpush.msra.mxu0 %v432
        %916 = vmatmul.f32.gmra.mxu0 %v773
        %v917 = vpop.f32.mrf.mxu0
        %v918 = vadd.f32 0.0, %v917
        %919 = vdwg.mxu0
        %920 = vmatpush.msra.mxu0 0.0
        %921 = vmatpush.msra.mxu0 0.0
        %922 = vmatpush.msra.mxu0 0.0
        %923 = vmatpush.msra.mxu0 0.0
        %924 = vmatpush.msra.mxu0 0.0
        %925 = vmatpush.msra.mxu0 0.0
        %926 = vmatpush.msra.mxu0 0.0
        %927 = vmatpush.msra.mxu0 0.0
        %928 = vmatpush.msra.mxu0 0.0
        %929 = vmatpush.msra.mxu0 0.0
        %930 = vmatpush.msra.mxu0 0.0
        %931 = vmatpush.msra.mxu0 0.0
        %932 = vmatpush.msra.mxu0 %v421
        %933 = vmatpush.msra.mxu0 %v420
        %934 = vmatpush.msra.mxu0 %v419
        %935 = vmatpush.msra.mxu0 %v418
        %936 = vmatmul.f32.gmra.mxu0 %v796
        %v937 = vpop.f32.mrf.mxu0
        %v938 = vadd.f32 %v918, %v937
        %939 = vdwg.mxu0
        %v940 = vmul.f32 %v899, %v718
        %v942 = vsel %vm487, %v940, 0
        %944 = vmatpush.msra.mxu0 0.0
        %945 = vmatpush.msra.mxu0 0.0
        %946 = vmatpush.msra.mxu0 0.0
        %947 = vmatpush.msra.mxu0 0.0
        %948 = vmatpush.msra.mxu0 0.0
        %949 = vmatpush.msra.mxu0 0.0
        %950 = vmatpush.msra.mxu0 0.0
        %951 = vmatpush.msra.mxu0 0.0
        %952 = vmatpush.msra.mxu0 0.0
        %953 = vmatpush.msra.mxu0 0.0
        %954 = vmatpush.msra.mxu0 0.0
        %955 = vmatpush.msra.mxu0 0.0
        %956 = vmatpush.msra.mxu0 %v448
        %957 = vmatpush.msra.mxu0 %v447
        %958 = vmatpush.msra.mxu0 %v446
        %959 = vmatpush.msra.mxu0 %v445
        %960 = vmatmul.f32.gmra.mxu0 %v942
        %v961 = vpop.f32.mrf.mxu0
        %v962 = vadd.f32 0.0, %v961
        %963 = vdwg.mxu0
        %v964 = vadd.f32 %v938, %v962
        %v965 = vadd.f32 %v964, %v711
        %v966 = vtanh.pop %v965
        %v967 = vsub.f32 1.0, %v838
        %v968 = vmul.f32 %v967, %v718
        %v969 = vmul.f32 %v838, %v966
        %v970 = vadd.f32 %v968, %v969
        %v971 = vpack.c.bf16 %v970, %v970
        %v973 = vsel %vm454, %v971, 0
        %975 = vmatpush.bf16.msra.mxu0 0
        %976 = vmatpush.bf16.msra.mxu0 0
        %977 = vmatpush.bf16.msra.mxu0 0
        %978 = vmatpush.bf16.msra.mxu0 0
        %979 = vmatpush.bf16.msra.mxu0 0
        %980 = vmatpush.bf16.msra.mxu0 0
        %981 = vmatpush.bf16.msra.mxu0 0
        %982 = vmatpush.bf16.msra.mxu0 %v973
        %983 = vmatmul.bf16.gmra.mxu0 %v452
        %v984 = vpop.f32.mrf.mxu0
        %v985 = vadd.f32 0.0, %v984
        %v986 = vpop.f32.mrf.mxu0
        %987 = vdwg.mxu0
        %988 = vmatpush.bf16.msra.mxu0 0
        %989 = vmatpush.bf16.msra.mxu0 0
        %990 = vmatpush.bf16.msra.mxu0 0
        %991 = vmatpush.bf16.msra.mxu0 0
        %992 = vmatpush.bf16.msra.mxu0 0
        %993 = vmatpush.bf16.msra.mxu0 0
        %994 = vmatpush.bf16.msra.mxu0 0
        %995 = vmatpush.bf16.msra.mxu0 %v973
        %996 = vmatmul.bf16.gmra.mxu0 %v472
        %v997 = vpop.f32.mrf.mxu0
        %v998 = vadd.f32 0.0, %v997
        %v999 = vpop.f32.mrf.mxu0
        %1000 = vdwg.mxu0
        %v1002 = vsel %vm487, %v970, 0
        %1004 = vmatpush.msra.mxu0 0.0
        %1005 = vmatpush.msra.mxu0 0.0
        %1006 = vmatpush.msra.mxu0 0.0
        %1007 = vmatpush.msra.mxu0 0.0
        %1008 = vmatpush.msra.mxu0 0.0
        %1009 = vmatpush.msra.mxu0 0.0
        %1010 = vmatpush.msra.mxu0 0.0
        %1011 = vmatpush.msra.mxu0 0.0
        %1012 = vmatpush.msra.mxu0 0.0
        %1013 = vmatpush.msra.mxu0 0.0
        %1014 = vmatpush.msra.mxu0 0.0
        %1015 = vmatpush.msra.mxu0 0.0
        %1016 = vmatpush.msra.mxu0 %v444
        %1017 = vmatpush.msra.mxu0 %v443
        %1018 = vmatpush.msra.mxu0 %v442
        %1019 = vmatpush.msra.mxu0 %v441
        %1020 = vmatmul.f32.gmra.mxu0 %v1002
        %v1021 = vpop.f32.mrf.mxu0
        %v1022 = vadd.f32 0.0, %v1021
        %1023 = vdwg.mxu0
        %v1025 = vsel %vm487, %v998, 0
        %1027 = vmatpush.msra.mxu0 0.0
        %1028 = vmatpush.msra.mxu0 0.0
        %1029 = vmatpush.msra.mxu0 0.0
        %1030 = vmatpush.msra.mxu0 0.0
        %1031 = vmatpush.msra.mxu0 0.0
        %1032 = vmatpush.msra.mxu0 0.0
        %1033 = vmatpush.msra.mxu0 0.0
        %1034 = vmatpush.msra.mxu0 0.0
        %1035 = vmatpush.msra.mxu0 0.0
        %1036 = vmatpush.msra.mxu0 0.0
        %1037 = vmatpush.msra.mxu0 0.0
        %1038 = vmatpush.msra.mxu0 0.0
        %1039 = vmatpush.msra.mxu0 %v425
        %1040 = vmatpush.msra.mxu0 %v424
        %1041 = vmatpush.msra.mxu0 %v423
        %1042 = vmatpush.msra.mxu0 %v422
        %1043 = vmatmul.f32.gmra.mxu0 %v1025
        %v1044 = vpop.f32.mrf.mxu0
        %v1045 = vadd.f32 0.0, %v1044
        %1046 = vdwg.mxu0
        %v1048 = vsel %vm487, %v985, 0
        %1050 = vmatpush.msra.mxu0 0.0
        %1051 = vmatpush.msra.mxu0 0.0
        %1052 = vmatpush.msra.mxu0 0.0
        %1053 = vmatpush.msra.mxu0 0.0
        %1054 = vmatpush.msra.mxu0 0.0
        %1055 = vmatpush.msra.mxu0 0.0
        %1056 = vmatpush.msra.mxu0 0.0
        %1057 = vmatpush.msra.mxu0 0.0
        %1058 = vmatpush.msra.mxu0 0.0
        %1059 = vmatpush.msra.mxu0 0.0
        %1060 = vmatpush.msra.mxu0 0.0
        %1061 = vmatpush.msra.mxu0 0.0
        %1062 = vmatpush.msra.mxu0 %v411
        %1063 = vmatpush.msra.mxu0 %v410
        %1064 = vmatpush.msra.mxu0 %v409
        %1065 = vmatpush.msra.mxu0 %v408
        %1066 = vmatmul.f32.gmra.mxu0 %v1048
        %v1067 = vpop.f32.mrf.mxu0
        %v1068 = vadd.f32 %v1045, %v1067
        %1069 = vdwg.mxu0
        %v1070 = vadd.f32 %v1068, %v1022
        %v1071 = vadd.f32 %v1070, %v559
        %v1072 = vxor.u32 %v1071, 2147483648
        %v1073 = vmul.f32 %v1072, 1.442695
        %v1074 = vpow.pop %v1073
        %v1075 = vadd.f32 %v1074, 1.0
        %v1076 = vrcp.pop %v1075
        %v1077 = vmul.f32 %v1075, %v1076
        %v1078 = vsub.f32 1.0, %v1077
        %v1079 = vmul.f32 %v1076, %v1078
        %v1080 = vadd.f32 %v1076, %v1079
        %vm1081 = vweird.f32 %v1075
        %vm1082 = vweird.f32 %v1076
        %vm1083 = vmor %vm1081, %vm1082
        %v1084 = vsel %vm1083, %v1076, %v1080
        %v1085 = vand.u32 2147483647, %v1075
        %vm1086 = vcmp.eq.f32.partialorder %v1085, 8.507059e+37
        %v1087 = vand.u32 %v1075, 2147483648
        %v1088 = vor.u32 1.1754944e-38, %v1087
        %v1089 = vsel %vm1086, %v1088, %v1084
        %v1090 = vmul.f32 1.0, %v1089
        %1091 = vmatpush.msra.mxu0 0.0
        %1092 = vmatpush.msra.mxu0 0.0
        %1093 = vmatpush.msra.mxu0 0.0
        %1094 = vmatpush.msra.mxu0 0.0
        %1095 = vmatpush.msra.mxu0 0.0
        %1096 = vmatpush.msra.mxu0 0.0
        %1097 = vmatpush.msra.mxu0 0.0
        %1098 = vmatpush.msra.mxu0 0.0
        %1099 = vmatpush.msra.mxu0 0.0
        %1100 = vmatpush.msra.mxu0 0.0
        %1101 = vmatpush.msra.mxu0 0.0
        %1102 = vmatpush.msra.mxu0 0.0
        %1103 = vmatpush.msra.mxu0 %v430
        %1104 = vmatpush.msra.mxu0 %v429
        %1105 = vmatpush.msra.mxu0 %v428
        %1106 = vmatpush.msra.mxu0 %v427
        %1107 = vmatmul.f32.gmra.mxu0 %v1025
        %v1108 = vpop.f32.mrf.mxu0
        %v1109 = vadd.f32 0.0, %v1108
        %1110 = vdwg.mxu0
        %1111 = vmatpush.msra.mxu0 0.0
        %1112 = vmatpush.msra.mxu0 0.0
        %1113 = vmatpush.msra.mxu0 0.0
        %1114 = vmatpush.msra.mxu0 0.0
        %1115 = vmatpush.msra.mxu0 0.0
        %1116 = vmatpush.msra.mxu0 0.0
        %1117 = vmatpush.msra.mxu0 0.0
        %1118 = vmatpush.msra.mxu0 0.0
        %1119 = vmatpush.msra.mxu0 0.0
        %1120 = vmatpush.msra.mxu0 0.0
        %1121 = vmatpush.msra.mxu0 0.0
        %1122 = vmatpush.msra.mxu0 0.0
        %1123 = vmatpush.msra.mxu0 %v416
        %1124 = vmatpush.msra.mxu0 %v415
        %1125 = vmatpush.msra.mxu0 %v414
        %1126 = vmatpush.msra.mxu0 %v413
        %1127 = vmatmul.f32.gmra.mxu0 %v1048
        %v1128 = vpop.f32.mrf.mxu0
        %v1129 = vadd.f32 %v1109, %v1128
        %1130 = vdwg.mxu0
        %v1131 = vadd.f32 %v1129, %v1022
        %v1132 = vadd.f32 %v1131, %v623
        %v1133 = vxor.u32 %v1132, 2147483648
        %v1134 = vmul.f32 %v1133, 1.442695
        %v1135 = vpow.pop %v1134
        %v1136 = vadd.f32 %v1135, 1.0
        %v1137 = vrcp.pop %v1136
        %v1138 = vmul.f32 %v1136, %v1137
        %v1139 = vsub.f32 1.0, %v1138
        %v1140 = vmul.f32 %v1137, %v1139
        %v1141 = vadd.f32 %v1137, %v1140
        %vm1142 = vweird.f32 %v1136
        %vm1143 = vweird.f32 %v1137
        %vm1144 = vmor %vm1142, %vm1143
        %v1145 = vsel %vm1144, %v1137, %v1141
        %v1146 = vand.u32 2147483647, %v1136
        %vm1147 = vcmp.eq.f32.partialorder %v1146, 8.507059e+37
        %v1148 = vand.u32 %v1136, 2147483648
        %v1149 = vor.u32 1.1754944e-38, %v1148
        %v1150 = vsel %vm1147, %v1149, %v1145
        %v1151 = vmul.f32 1.0, %v1150
        %1152 = vmatpush.msra.mxu0 0.0
        %1153 = vmatpush.msra.mxu0 0.0
        %1154 = vmatpush.msra.mxu0 0.0
        %1155 = vmatpush.msra.mxu0 0.0
        %1156 = vmatpush.msra.mxu0 0.0
        %1157 = vmatpush.msra.mxu0 0.0
        %1158 = vmatpush.msra.mxu0 0.0
        %1159 = vmatpush.msra.mxu0 0.0
        %1160 = vmatpush.msra.mxu0 0.0
        %1161 = vmatpush.msra.mxu0 0.0
        %1162 = vmatpush.msra.mxu0 0.0
        %1163 = vmatpush.msra.mxu0 0.0
        %1164 = vmatpush.msra.mxu0 %v435
        %1165 = vmatpush.msra.mxu0 %v434
        %1166 = vmatpush.msra.mxu0 %v433
        %1167 = vmatpush.msra.mxu0 %v432
        %1168 = vmatmul.f32.gmra.mxu0 %v1025
        %v1169 = vpop.f32.mrf.mxu0
        %v1170 = vadd.f32 0.0, %v1169
        %1171 = vdwg.mxu0
        %1172 = vmatpush.msra.mxu0 0.0
        %1173 = vmatpush.msra.mxu0 0.0
        %1174 = vmatpush.msra.mxu0 0.0
        %1175 = vmatpush.msra.mxu0 0.0
        %1176 = vmatpush.msra.mxu0 0.0
        %1177 = vmatpush.msra.mxu0 0.0
        %1178 = vmatpush.msra.mxu0 0.0
        %1179 = vmatpush.msra.mxu0 0.0
        %1180 = vmatpush.msra.mxu0 0.0
        %1181 = vmatpush.msra.mxu0 0.0
        %1182 = vmatpush.msra.mxu0 0.0
        %1183 = vmatpush.msra.mxu0 0.0
        %1184 = vmatpush.msra.mxu0 %v421
        %1185 = vmatpush.msra.mxu0 %v420
        %1186 = vmatpush.msra.mxu0 %v419
        %1187 = vmatpush.msra.mxu0 %v418
        %1188 = vmatmul.f32.gmra.mxu0 %v1048
        %v1189 = vpop.f32.mrf.mxu0
        %v1190 = vadd.f32 %v1170, %v1189
        %1191 = vdwg.mxu0
        %v1192 = vmul.f32 %v1151, %v970
        %v1194 = vsel %vm487, %v1192, 0
        %1196 = vmatpush.msra.mxu0 0.0
        %1197 = vmatpush.msra.mxu0 0.0
        %1198 = vmatpush.msra.mxu0 0.0
        %1199 = vmatpush.msra.mxu0 0.0
        %1200 = vmatpush.msra.mxu0 0.0
        %1201 = vmatpush.msra.mxu0 0.0
        %1202 = vmatpush.msra.mxu0 0.0
        %1203 = vmatpush.msra.mxu0 0.0
        %1204 = vmatpush.msra.mxu0 0.0
        %1205 = vmatpush.msra.mxu0 0.0
        %1206 = vmatpush.msra.mxu0 0.0
        %1207 = vmatpush.msra.mxu0 0.0
        %1208 = vmatpush.msra.mxu0 %v448
        %1209 = vmatpush.msra.mxu0 %v447
        %1210 = vmatpush.msra.mxu0 %v446
        %1211 = vmatpush.msra.mxu0 %v445
        %1212 = vmatmul.f32.gmra.mxu0 %v1194
        %v1213 = vpop.f32.mrf.mxu0
        %v1214 = vadd.f32 0.0, %v1213
        %1215 = vdwg.mxu0
        %v1216 = vadd.f32 %v1190, %v1214
        %v1217 = vadd.f32 %v1216, %v711
        %v1218 = vtanh.pop %v1217
        %v1219 = vsub.f32 1.0, %v1090
        %v1220 = vmul.f32 %v1219, %v970
        %v1221 = vmul.f32 %v1090, %v1218
        %v1222 = vadd.f32 %v1220, %v1221
        %1223 = vst.msk [vmem:[%s403] sm:$0xff] %vm487, %v1222
        %s1224 = sand.u32 %s209, 1
        %s1225 = scalar_lea.sflag [#allocation4], %s1224
        %s1226 = sand.u32 %s209, 1
        %s1227 = smul.addr %s1226, 8
        %s1228 = scalar_lea.vmem [#allocation13], %s1227
        // Predicated region
        $region77: #{tpu_custom_call.1} parent=51 // pred_check
          %p1229 = pneg %p219
        $region78: #{tpu_custom_call.1} parent=51 // pred_check_branch
          %1231 = sbr.rel (%p1229) target = $region80
        $region79: #{tpu_custom_call.1} parent=51 // pred_region
          %1233 = vsyncadd %s1225, 0
          %s1234 = smul.addr %s28, 8
          %s1235 = scalar_lea.hbm %s8, %s1234
          %s1237 = sshll.u32 %s1228, 4
          %s1238 = int_to_ptr.vmem [resolvable:$true] %s1237
          %s1239 = sshll.u32 %s1235, 4
          %s1240 = int_to_ptr.hbm [resolvable:$true] %s1239
          %1242 = dma.vmem_to_hbm [thread:$0]  %s1238, 128, %s1240, %s1225
        $region80: #{tpu_custom_call.1} parent=51 // pred_fallthru
          _
      $region52: #{tpu_custom_call.1} parent=5 // pred_fallthru
        _
      %p1243 = scmp.le.s32.totalorder 2, %s23
      // Predicated region
      $region81: #{tpu_custom_call.1} parent=5 // pred_check
        %p1244 = pneg %p1243
      $region82: #{tpu_custom_call.1} parent=5 // pred_check_branch
        %1246 = sbr.rel (%p1244) target = $region84
      $region83: #{tpu_custom_call.1} parent=5 // pred_region
        %s1247 = ssub.s32 %s23, 2
        // Predicated region
        $region85: #{tpu_custom_call.1} parent=83 // pred_check
          %p1248 = pneg %p225
        $region86: #{tpu_custom_call.1} parent=83 // pred_check_branch
          %1250 = sbr.rel (%p1248) target = $region88
        $region87: #{tpu_custom_call.1} parent=83 // pred_region
          %s1251 = sand.u32 %s210, 1
          %s1252 = scalar_lea.sflag [#allocation4], %s1251
          %s1253 = sand.u32 %s210, 1
          %s1254 = smul.addr %s1253, 8
          %s1255 = scalar_lea.vmem [#allocation13], %s1254
          %1257 = dma.done %s1252, 128
        $region88: #{tpu_custom_call.1} parent=83 // pred_fallthru
          _
      $region84: #{tpu_custom_call.1} parent=5 // pred_fallthru
        _
    $region6: #{tpu_custom_call.1} parent=1 // loop_footer
      %s27 = sadd.s32 1, %s23
    $region7: #{tpu_custom_call.1} parent=1 // loop_footer_branch
      %22 = sbr.rel target = $region3
    $region8: #{tpu_custom_call.1} parent=1 // loop_exit
      _
    %1258 = vsyncpa [#allocation3], 1
    %s1259 = scalar_lea.sflag [#allocation3], 1
    %1260 = vsyncpa %s1259, 1
    %1261 = vsyncpa [#allocation6], 1
    %s1262 = scalar_lea.sflag [#allocation6], 1
    %1263 = vsyncpa %s1262, 1
    %1264 = vsyncpa [#allocation9], 1
    %1265 = vsyncpa [#allocation12], 1
    %1266 = vsyncpa [#allocation4], 1
    %s1267 = scalar_lea.sflag [#allocation4], 1
    %1268 = vsyncpa %s1267, 1

</llo_original>
